<compile_context>
chip_gen: v7x
topology: tpu7x:2x2x1
jax: 0.10.0
libtpu: 0.0.40
codegen_flags: <defaults>
</compile_context>

<pallas_src>
import functools

import jax
import jax.numpy as jnp
from jax.experimental import pallas as pl
from jax.experimental.pallas import tpu as pltpu


def _silu(a):
    # exact sigmoid (EUP exp + VPU ops); avoids approx-reciprocal error.
    return a * (1.0 / (1.0 + jnp.exp(-a)))


def _bottleneck_kernel(x_ref, w1_ref, b1_ref, w2_ref, b2_ref, o_ref, ypad_ref,
                       *, W, add):
    """One batch element per grid step.

    x_ref:    (1, C1, S)      input, S = H*W (lane-dense)
    w1_ref:   (C_, C1)        BN-folded 1x1 conv weight
    b1_ref:   (C_, 1)         BN-folded 1x1 conv bias
    w2_ref:   (9, C2, C_)     BN-folded 3x3 conv weight, tap-major (tap = 3*ky + kx)
    b2_ref:   (C2, 1)         BN-folded 3x3 conv bias
    o_ref:    (1, C2, S)      output
    ypad_ref: (C_, S+2W+2)    VMEM scratch: zero-padded flat hidden activation
    """
    x = x_ref[0]                                   # (C1, S), native dtype
    S = x.shape[1]
    C2 = o_ref.shape[1]

    # ---- cv1: 1x1 conv (+ folded BN) + SiLU.  f32 accumulation on the MXU. ----
    a1 = jnp.dot(w1_ref[...], x, preferred_element_type=jnp.float32)
    a1 = a1 + b1_ref[...]                          # (C_,1) implicit broadcast
    y1 = _silu(a1).astype(x.dtype)                 # hidden activation, io dtype

    # Zero-padded flat activation so every 3x3 tap is a static slice.
    # Top/bottom (row) out-of-range taps land in the pad (exact zeros).
    ypad_ref[...] = jnp.zeros_like(ypad_ref)
    ypad_ref[:, W + 1:W + 1 + S] = y1

    # Column masks kill the left/right row-wrap of the flat (row-major) shift.
    col = jax.lax.broadcasted_iota(jnp.int32, (1, S), 1) % W
    mask_m1 = col != 0                             # dx = -1 invalid at w == 0
    mask_p1 = col != (W - 1)                       # dx = +1 invalid at w == W-1

    # ---- cv2: 3x3 conv (+ folded BN) as 9 accumulated MXU matmuls. ----
    acc = jnp.zeros((C2, S), jnp.float32)
    for ky in range(3):
        for kx in range(3):
            dy, dx = ky - 1, kx - 1
            start = (W + 1) + dy * W + dx          # static offset into the pad buffer
            tap_in = ypad_ref[:, start:start + S]  # (C_, S)
            if dx == -1:
                tap_in = jnp.where(mask_m1, tap_in, 0)
            elif dx == 1:
                tap_in = jnp.where(mask_p1, tap_in, 0)
            acc = acc + jnp.dot(w2_ref[3 * ky + kx], tap_in,
                                preferred_element_type=jnp.float32)

    out = _silu(acc + b2_ref[...])                 # (C2, S)
    if add:                                        # residual (only when C1 == C2)
        out = out + x.astype(jnp.float32)
    o_ref[0] = out.astype(o_ref.dtype)


def bottleneck_forward(x, w1, b1, w2, b2, *, add):
    """x: (N, C1, H, W) NCHW.  w1: (C_, C1).  b1: (C_,).  w2: (C2, C_, 3, 3).  b2: (C2,)."""
    N, C1, H, Wd = x.shape
    C_h = w1.shape[0]
    C2 = w2.shape[0]
    S = H * Wd
    assert w1.shape == (C_h, C1) and w2.shape == (C2, C_h, 3, 3)
    if add:
        assert C1 == C2, "residual add requires c1 == c2"

    # Free metadata reshapes only — no extra HBM materialization.
    x_flat = x.reshape(N, C1, S)
    w2_taps = jnp.transpose(w2, (2, 3, 0, 1)).reshape(9, C2, C_h)  # tap-major
    b1c = b1.reshape(C_h, 1)
    b2c = b2.reshape(C2, 1)

    kernel = functools.partial(_bottleneck_kernel, W=Wd, add=add)

    out = pl.pallas_call(
        kernel,
        out_shape=jax.ShapeDtypeStruct((N, C2, S), x.dtype),
        grid_spec=pltpu.PrefetchScalarGridSpec(
            num_scalar_prefetch=0,
            grid=(N,),
            in_specs=[
                pl.BlockSpec((1, C1, S), lambda n: (n, 0, 0)),
                pl.BlockSpec((C_h, C1), lambda n: (0, 0)),
                pl.BlockSpec((C_h, 1), lambda n: (0, 0)),
                pl.BlockSpec((9, C2, C_h), lambda n: (0, 0, 0)),
                pl.BlockSpec((C2, 1), lambda n: (0, 0)),
            ],
            out_specs=pl.BlockSpec((1, C2, S), lambda n: (n, 0, 0)),
            scratch_shapes=[pltpu.VMEM((C_h, S + 2 * Wd + 2), x.dtype)],
        ),
        compiler_params=pltpu.CompilerParams(
            dimension_semantics=("parallel",),
            vmem_limit_bytes=32 * 1024 * 1024,
        ),
    )(x_flat, w1, b1c, w2_taps, b2c)

    return out.reshape(N, C2, H, Wd)


def bottleneck_reference(x, w1, b1, w2, b2, *, add):
    """Plain-JAX reference mirroring the PyTorch forward (BN already folded)."""
    hi = jax.lax.Precision.HIGHEST
    a1 = jnp.einsum("oc,nchw->nohw", w1, x, precision=hi) + b1[None, :, None, None]
    y1 = _silu(a1)
    a2 = jax.lax.conv_general_dilated(
        y1, w2, window_strides=(1, 1), padding=((1, 1), (1, 1)),
        dimension_numbers=("NCHW", "OIHW", "NCHW"), precision=hi)
    a2 = a2 + b2[None, :, None, None]
    y2 = _silu(a2)
    return x + y2 if add else y2


if __name__ == "__main__":
    key = jax.random.PRNGKey(0)
    kx, k1, kb1, k2, kb2 = jax.random.split(key, 5)

    # Small shapes consistent with the module; shortcut => c1 == c2.
    N, C1, H, W = 2, 4, 16, 16
    shortcut, e = True, 0.5
    C2 = C1
    C_h = max(1, int(C2 * e))
    add = shortcut and C1 == C2

    x = jax.random.normal(kx, (N, C1, H, W), dtype=jnp.float32)
    # Deterministic BN-folded conv parameters.
    w1 = jax.random.normal(k1, (C_h, C1), dtype=jnp.float32) * 0.3
    b1 = jax.random.normal(kb1, (C_h,), dtype=jnp.float32) * 0.1
    w2 = jax.random.normal(k2, (C2, C_h, 3, 3), dtype=jnp.float32) * 0.3
    b2 = jax.random.normal(kb2, (C2,), dtype=jnp.float32) * 0.1

    out = jax.block_until_ready(bottleneck_forward(x, w1, b1, w2, b2, add=add))
    ref = bottleneck_reference(x, w1, b1, w2, b2, add=add)

    assert out.shape == (N, C2, H, W), out.shape
    assert jnp.allclose(out, ref, rtol=1e-3, atol=1e-3), float(jnp.max(jnp.abs(out - ref)))

    print("KERNEL_OK")
</pallas_src>

<mosaic_0001>
module attributes {stable_mosaic.version = 11 : i64} {
  func.func @_bottleneck_kernel(%arg0: i32, %arg1: memref<1x4x256xf32, #tpu.memory_space<vmem>>, %arg2: memref<2x4xf32, #tpu.memory_space<vmem>>, %arg3: memref<2x1xf32, #tpu.memory_space<vmem>>, %arg4: memref<9x4x2xf32, #tpu.memory_space<vmem>>, %arg5: memref<4x1xf32, #tpu.memory_space<vmem>>, %arg6: memref<1x4x256xf32, #tpu.memory_space<vmem>>, %arg7: memref<2x290xf32, #tpu.memory_space<vmem>>) attributes {dimension_semantics = [#tpu.dimension_semantics<parallel>], iteration_bounds = array<i64: 2>, scalar_prefetch = 0 : i64, scratch_operands = 1 : i64, tpu.core_type = #tpu.core_type<tc>, window_params = [{transform_indices = @transform_0, window_bounds = array<i64: 1, 4, 256>}, {pipeline_mode = #tpu.pipeline_mode<synchronous>, transform_indices = @transform_1, window_bounds = array<i64: 2, 4>}, {pipeline_mode = #tpu.pipeline_mode<synchronous>, transform_indices = @transform_2, window_bounds = array<i64: 2, 1>}, {pipeline_mode = #tpu.pipeline_mode<synchronous>, transform_indices = @transform_3, window_bounds = array<i64: 9, 4, 2>}, {pipeline_mode = #tpu.pipeline_mode<synchronous>, transform_indices = @transform_4, window_bounds = array<i64: 4, 1>}, {transform_indices = @transform_5, window_bounds = array<i64: 1, 4, 256>}]} {
    %c0 = arith.constant 0 : index
    %c0_0 = arith.constant 0 : index
    %c0_1 = arith.constant 0 : index
    %0 = vector.load %arg1[%c0, %c0_0, %c0_1] : memref<1x4x256xf32, #tpu.memory_space<vmem>>, vector<1x4x256xf32>
    %1 = vector.shape_cast %0 : vector<1x4x256xf32> to vector<4x256xf32>
    %c0_2 = arith.constant 0 : index
    %c0_3 = arith.constant 0 : index
    %2 = vector.load %arg2[%c0_2, %c0_3] : memref<2x4xf32, #tpu.memory_space<vmem>>, vector<2x4xf32>
    %cst = arith.constant dense<0.000000e+00> : vector<2x256xf32>
    %3 = tpu.matmul %2, %1, %cst {dimension_numbers = #tpu.dot_dimension_numbers<[1], [0], [0], [1], [0, 0, 1, 1], [], []>} : vector<2x4xf32>, vector<4x256xf32>, vector<2x256xf32> -> vector<2x256xf32>
    %c0_4 = arith.constant 0 : index
    %c0_5 = arith.constant 0 : index
    %4 = vector.load %arg3[%c0_4, %c0_5] : memref<2x1xf32, #tpu.memory_space<vmem>>, vector<2x1xf32>
    %5 = vector.broadcast %4 : vector<2x1xf32> to vector<2x256xf32>
    %6 = arith.addf %3, %5 : vector<2x256xf32>
    %cst_6 = arith.constant 0.000000e+00 : f32
    %7 = vector.broadcast %cst_6 : f32 to vector<2x256xf32>
    %8 = arith.subf %7, %6 : vector<2x256xf32>
    %9 = math.exp %8 : vector<2x256xf32>
    %cst_7 = arith.constant 1.000000e+00 : f32
    %10 = vector.broadcast %cst_7 : f32 to vector<2x256xf32>
    %11 = arith.addf %10, %9 : vector<2x256xf32>
    %cst_8 = arith.constant 1.000000e+00 : f32
    %12 = vector.broadcast %cst_8 : f32 to vector<2x256xf32>
    %13 = arith.divf %12, %11 : vector<2x256xf32>
    %14 = arith.mulf %6, %13 : vector<2x256xf32>
    %cst_9 = arith.constant 0.000000e+00 : f32
    %15 = vector.broadcast %cst_9 : f32 to vector<2x290xf32>
    %c0_10 = arith.constant 0 : index
    %c0_11 = arith.constant 0 : index
    %16 = vector.load %arg7[%c0_10, %c0_11] : memref<2x290xf32, #tpu.memory_space<vmem>>, vector<2x290xf32>
    tpu.vector_store %arg7[%c0_10, %c0_11], %15 {strides = array<i32>} : memref<2x290xf32, #tpu.memory_space<vmem>>, vector<2x290xf32>,
    %c0_12 = arith.constant 0 : index
    %c17 = arith.constant 17 : index
    %17 = vector.load %arg7[%c0_12, %c17] : memref<2x290xf32, #tpu.memory_space<vmem>>, vector<2x256xf32>
    tpu.vector_store %arg7[%c0_12, %c17], %14 {strides = array<i32>} : memref<2x290xf32, #tpu.memory_space<vmem>>, vector<2x256xf32>,
    %18 = tpu.iota {dimensions = array<i32: 1>} : vector<1x256xi32>
    %c16_i32 = arith.constant 16 : i32
    %c0_i32 = arith.constant 0 : i32
    %19 = arith.cmpi eq, %c16_i32, %c0_i32 : i32
    %c1_i32 = arith.constant 1 : i32
    %20 = arith.select %19, %c1_i32, %c16_i32 : i32
    %21 = vector.broadcast %20 : i32 to vector<1x256xi32>
    %22 = arith.remsi %18, %21 : vector<1x256xi32>
    %c0_i32_13 = arith.constant 0 : i32
    %23 = vector.broadcast %c0_i32_13 : i32 to vector<1x256xi32>
    %24 = arith.cmpi ne, %22, %23 : vector<1x256xi32>
    %c0_i32_14 = arith.constant 0 : i32
    %25 = vector.broadcast %c0_i32_14 : i32 to vector<1x256xi32>
    %26 = arith.cmpi slt, %22, %25 : vector<1x256xi32>
    %c0_i32_15 = arith.constant 0 : i32
    %27 = arith.cmpi slt, %20, %c0_i32_15 : i32
    %28 = vector.broadcast %27 : i1 to vector<1x256xi1>
    %29 = vector.broadcast %28 : vector<1x256xi1> to vector<1x256xi1>
    %30 = arith.xori %26, %29 : vector<1x256xi1>
    %31 = arith.andi %30, %24 : vector<1x256xi1>
    %32 = vector.broadcast %20 : i32 to vector<1x256xi32>
    %33 = arith.addi %22, %32 : vector<1x256xi32>
    %34 = arith.select %31, %33, %22 : vector<1x256xi1>, vector<1x256xi32>
    %c0_i32_16 = arith.constant 0 : i32
    %35 = vector.broadcast %c0_i32_16 : i32 to vector<1x256xi32>
    %36 = arith.cmpi ne, %34, %35 : vector<1x256xi32>
    %c15_i32 = arith.constant 15 : i32
    %37 = vector.broadcast %c15_i32 : i32 to vector<1x256xi32>
    %38 = arith.cmpi ne, %34, %37 : vector<1x256xi32>
    %cst_17 = arith.constant 0.000000e+00 : f32
    %39 = vector.broadcast %cst_17 : f32 to vector<4x256xf32>
    %c0_18 = arith.constant 0 : index
    %c0_19 = arith.constant 0 : index
    %40 = vector.load %arg7[%c0_18, %c0_19] : memref<2x290xf32, #tpu.memory_space<vmem>>, vector<2x256xf32>
    %c0_i32_20 = arith.constant 0 : i32
    %41 = arith.sitofp %c0_i32_20 : i32 to f32
    %42 = vector.shape_cast %36 : vector<1x256xi1> to vector<1x256xi1>
    %43 = vector.broadcast %42 : vector<1x256xi1> to vector<2x256xi1>
    %44 = vector.broadcast %41 : f32 to vector<2x256xf32>
    %45 = arith.select %43, %40, %44 : vector<2x256xi1>, vector<2x256xf32>
    %c0_21 = arith.constant 0 : index
    %c0_22 = arith.constant 0 : index
    %c0_23 = arith.constant 0 : index
    %46 = vector.load %arg4[%c0_21, %c0_22, %c0_23] : memref<9x4x2xf32, #tpu.memory_space<vmem>>, vector<1x4x2xf32>
    %47 = vector.shape_cast %46 : vector<1x4x2xf32> to vector<4x2xf32>
    %cst_24 = arith.constant dense<0.000000e+00> : vector<4x256xf32>
    %48 = tpu.matmul %47, %45, %cst_24 {dimension_numbers = #tpu.dot_dimension_numbers<[1], [0], [0], [1], [0, 0, 1, 1], [], []>} : vector<4x2xf32>, vector<2x256xf32>, vector<4x256xf32> -> vector<4x256xf32>
    %49 = arith.addf %39, %48 : vector<4x256xf32>
    %c0_25 = arith.constant 0 : index
    %c1 = arith.constant 1 : index
    %50 = vector.load %arg7[%c0_25, %c1] : memref<2x290xf32, #tpu.memory_space<vmem>>, vector<2x256xf32>
    %c1_26 = arith.constant 1 : index
    %c0_27 = arith.constant 0 : index
    %c0_28 = arith.constant 0 : index
    %51 = vector.load %arg4[%c1_26, %c0_27, %c0_28] : memref<9x4x2xf32, #tpu.memory_space<vmem>>, vector<1x4x2xf32>
    %52 = vector.shape_cast %51 : vector<1x4x2xf32> to vector<4x2xf32>
    %cst_29 = arith.constant dense<0.000000e+00> : vector<4x256xf32>
    %53 = tpu.matmul %52, %50, %cst_29 {dimension_numbers = #tpu.dot_dimension_numbers<[1], [0], [0], [1], [0, 0, 1, 1], [], []>} : vector<4x2xf32>, vector<2x256xf32>, vector<4x256xf32> -> vector<4x256xf32>
    %54 = arith.addf %49, %53 : vector<4x256xf32>
    %c0_30 = arith.constant 0 : index
    %c2 = arith.constant 2 : index
    %55 = vector.load %arg7[%c0_30, %c2] : memref<2x290xf32, #tpu.memory_space<vmem>>, vector<2x256xf32>
    %c0_i32_31 = arith.constant 0 : i32
    %56 = arith.sitofp %c0_i32_31 : i32 to f32
    %57 = vector.shape_cast %38 : vector<1x256xi1> to vector<1x256xi1>
    %58 = vector.broadcast %57 : vector<1x256xi1> to vector<2x256xi1>
    %59 = vector.broadcast %56 : f32 to vector<2x256xf32>
    %60 = arith.select %58, %55, %59 : vector<2x256xi1>, vector<2x256xf32>
    %c2_32 = arith.constant 2 : index
    %c0_33 = arith.constant 0 : index
    %c0_34 = arith.constant 0 : index
    %61 = vector.load %arg4[%c2_32, %c0_33, %c0_34] : memref<9x4x2xf32, #tpu.memory_space<vmem>>, vector<1x4x2xf32>
    %62 = vector.shape_cast %61 : vector<1x4x2xf32> to vector<4x2xf32>
    %cst_35 = arith.constant dense<0.000000e+00> : vector<4x256xf32>
    %63 = tpu.matmul %62, %60, %cst_35 {dimension_numbers = #tpu.dot_dimension_numbers<[1], [0], [0], [1], [0, 0, 1, 1], [], []>} : vector<4x2xf32>, vector<2x256xf32>, vector<4x256xf32> -> vector<4x256xf32>
    %64 = arith.addf %54, %63 : vector<4x256xf32>
    %c0_36 = arith.constant 0 : index
    %c16 = arith.constant 16 : index
    %65 = vector.load %arg7[%c0_36, %c16] : memref<2x290xf32, #tpu.memory_space<vmem>>, vector<2x256xf32>
    %c0_i32_37 = arith.constant 0 : i32
    %66 = arith.sitofp %c0_i32_37 : i32 to f32
    %67 = vector.shape_cast %36 : vector<1x256xi1> to vector<1x256xi1>
    %68 = vector.broadcast %67 : vector<1x256xi1> to vector<2x256xi1>
    %69 = vector.broadcast %66 : f32 to vector<2x256xf32>
    %70 = arith.select %68, %65, %69 : vector<2x256xi1>, vector<2x256xf32>
    %c3 = arith.constant 3 : index
    %c0_38 = arith.constant 0 : index
    %c0_39 = arith.constant 0 : index
    %71 = vector.load %arg4[%c3, %c0_38, %c0_39] : memref<9x4x2xf32, #tpu.memory_space<vmem>>, vector<1x4x2xf32>
    %72 = vector.shape_cast %71 : vector<1x4x2xf32> to vector<4x2xf32>
    %cst_40 = arith.constant dense<0.000000e+00> : vector<4x256xf32>
    %73 = tpu.matmul %72, %70, %cst_40 {dimension_numbers = #tpu.dot_dimension_numbers<[1], [0], [0], [1], [0, 0, 1, 1], [], []>} : vector<4x2xf32>, vector<2x256xf32>, vector<4x256xf32> -> vector<4x256xf32>
    %74 = arith.addf %64, %73 : vector<4x256xf32>
    %c0_41 = arith.constant 0 : index
    %c17_42 = arith.constant 17 : index
    %75 = vector.load %arg7[%c0_41, %c17_42] : memref<2x290xf32, #tpu.memory_space<vmem>>, vector<2x256xf32>
    %c4 = arith.constant 4 : index
    %c0_43 = arith.constant 0 : index
    %c0_44 = arith.constant 0 : index
    %76 = vector.load %arg4[%c4, %c0_43, %c0_44] : memref<9x4x2xf32, #tpu.memory_space<vmem>>, vector<1x4x2xf32>
    %77 = vector.shape_cast %76 : vector<1x4x2xf32> to vector<4x2xf32>
    %cst_45 = arith.constant dense<0.000000e+00> : vector<4x256xf32>
    %78 = tpu.matmul %77, %75, %cst_45 {dimension_numbers = #tpu.dot_dimension_numbers<[1], [0], [0], [1], [0, 0, 1, 1], [], []>} : vector<4x2xf32>, vector<2x256xf32>, vector<4x256xf32> -> vector<4x256xf32>
    %79 = arith.addf %74, %78 : vector<4x256xf32>
    %c0_46 = arith.constant 0 : index
    %c18 = arith.constant 18 : index
    %80 = vector.load %arg7[%c0_46, %c18] : memref<2x290xf32, #tpu.memory_space<vmem>>, vector<2x256xf32>
    %c0_i32_47 = arith.constant 0 : i32
    %81 = arith.sitofp %c0_i32_47 : i32 to f32
    %82 = vector.shape_cast %38 : vector<1x256xi1> to vector<1x256xi1>
    %83 = vector.broadcast %82 : vector<1x256xi1> to vector<2x256xi1>
    %84 = vector.broadcast %81 : f32 to vector<2x256xf32>
    %85 = arith.select %83, %80, %84 : vector<2x256xi1>, vector<2x256xf32>
    %c5 = arith.constant 5 : index
    %c0_48 = arith.constant 0 : index
    %c0_49 = arith.constant 0 : index
    %86 = vector.load %arg4[%c5, %c0_48, %c0_49] : memref<9x4x2xf32, #tpu.memory_space<vmem>>, vector<1x4x2xf32>
    %87 = vector.shape_cast %86 : vector<1x4x2xf32> to vector<4x2xf32>
    %cst_50 = arith.constant dense<0.000000e+00> : vector<4x256xf32>
    %88 = tpu.matmul %87, %85, %cst_50 {dimension_numbers = #tpu.dot_dimension_numbers<[1], [0], [0], [1], [0, 0, 1, 1], [], []>} : vector<4x2xf32>, vector<2x256xf32>, vector<4x256xf32> -> vector<4x256xf32>
    %89 = arith.addf %79, %88 : vector<4x256xf32>
    %c0_51 = arith.constant 0 : index
    %c32 = arith.constant 32 : index
    %90 = vector.load %arg7[%c0_51, %c32] : memref<2x290xf32, #tpu.memory_space<vmem>>, vector<2x256xf32>
    %c0_i32_52 = arith.constant 0 : i32
    %91 = arith.sitofp %c0_i32_52 : i32 to f32
    %92 = vector.shape_cast %36 : vector<1x256xi1> to vector<1x256xi1>
    %93 = vector.broadcast %92 : vector<1x256xi1> to vector<2x256xi1>
    %94 = vector.broadcast %91 : f32 to vector<2x256xf32>
    %95 = arith.select %93, %90, %94 : vector<2x256xi1>, vector<2x256xf32>
    %c6 = arith.constant 6 : index
    %c0_53 = arith.constant 0 : index
    %c0_54 = arith.constant 0 : index
    %96 = vector.load %arg4[%c6, %c0_53, %c0_54] : memref<9x4x2xf32, #tpu.memory_space<vmem>>, vector<1x4x2xf32>
    %97 = vector.shape_cast %96 : vector<1x4x2xf32> to vector<4x2xf32>
    %cst_55 = arith.constant dense<0.000000e+00> : vector<4x256xf32>
    %98 = tpu.matmul %97, %95, %cst_55 {dimension_numbers = #tpu.dot_dimension_numbers<[1], [0], [0], [1], [0, 0, 1, 1], [], []>} : vector<4x2xf32>, vector<2x256xf32>, vector<4x256xf32> -> vector<4x256xf32>
    %99 = arith.addf %89, %98 : vector<4x256xf32>
    %c0_56 = arith.constant 0 : index
    %c33 = arith.constant 33 : index
    %100 = vector.load %arg7[%c0_56, %c33] : memref<2x290xf32, #tpu.memory_space<vmem>>, vector<2x256xf32>
    %c7 = arith.constant 7 : index
    %c0_57 = arith.constant 0 : index
    %c0_58 = arith.constant 0 : index
    %101 = vector.load %arg4[%c7, %c0_57, %c0_58] : memref<9x4x2xf32, #tpu.memory_space<vmem>>, vector<1x4x2xf32>
    %102 = vector.shape_cast %101 : vector<1x4x2xf32> to vector<4x2xf32>
    %cst_59 = arith.constant dense<0.000000e+00> : vector<4x256xf32>
    %103 = tpu.matmul %102, %100, %cst_59 {dimension_numbers = #tpu.dot_dimension_numbers<[1], [0], [0], [1], [0, 0, 1, 1], [], []>} : vector<4x2xf32>, vector<2x256xf32>, vector<4x256xf32> -> vector<4x256xf32>
    %104 = arith.addf %99, %103 : vector<4x256xf32>
    %c0_60 = arith.constant 0 : index
    %c34 = arith.constant 34 : index
    %105 = vector.load %arg7[%c0_60, %c34] : memref<2x290xf32, #tpu.memory_space<vmem>>, vector<2x256xf32>
    %c0_i32_61 = arith.constant 0 : i32
    %106 = arith.sitofp %c0_i32_61 : i32 to f32
    %107 = vector.shape_cast %38 : vector<1x256xi1> to vector<1x256xi1>
    %108 = vector.broadcast %107 : vector<1x256xi1> to vector<2x256xi1>
    %109 = vector.broadcast %106 : f32 to vector<2x256xf32>
    %110 = arith.select %108, %105, %109 : vector<2x256xi1>, vector<2x256xf32>
    %c8 = arith.constant 8 : index
    %c0_62 = arith.constant 0 : index
    %c0_63 = arith.constant 0 : index
    %111 = vector.load %arg4[%c8, %c0_62, %c0_63] : memref<9x4x2xf32, #tpu.memory_space<vmem>>, vector<1x4x2xf32>
    %112 = vector.shape_cast %111 : vector<1x4x2xf32> to vector<4x2xf32>
    %cst_64 = arith.constant dense<0.000000e+00> : vector<4x256xf32>
    %113 = tpu.matmul %112, %110, %cst_64 {dimension_numbers = #tpu.dot_dimension_numbers<[1], [0], [0], [1], [0, 0, 1, 1], [], []>} : vector<4x2xf32>, vector<2x256xf32>, vector<4x256xf32> -> vector<4x256xf32>
    %114 = arith.addf %104, %113 : vector<4x256xf32>
    %c0_65 = arith.constant 0 : index
    %c0_66 = arith.constant 0 : index
    %115 = vector.load %arg5[%c0_65, %c0_66] : memref<4x1xf32, #tpu.memory_space<vmem>>, vector<4x1xf32>
    %116 = vector.broadcast %115 : vector<4x1xf32> to vector<4x256xf32>
    %117 = arith.addf %114, %116 : vector<4x256xf32>
    %cst_67 = arith.constant 0.000000e+00 : f32
    %118 = vector.broadcast %cst_67 : f32 to vector<4x256xf32>
    %119 = arith.subf %118, %117 : vector<4x256xf32>
    %120 = math.exp %119 : vector<4x256xf32>
    %cst_68 = arith.constant 1.000000e+00 : f32
    %121 = vector.broadcast %cst_68 : f32 to vector<4x256xf32>
    %122 = arith.addf %121, %120 : vector<4x256xf32>
    %cst_69 = arith.constant 1.000000e+00 : f32
    %123 = vector.broadcast %cst_69 : f32 to vector<4x256xf32>
    %124 = arith.divf %123, %122 : vector<4x256xf32>
    %125 = arith.mulf %117, %124 : vector<4x256xf32>
    %126 = arith.addf %125, %1 : vector<4x256xf32>
    %c0_70 = arith.constant 0 : index
    %c0_71 = arith.constant 0 : index
    %c0_72 = arith.constant 0 : index
    %127 = vector.load %arg6[%c0_70, %c0_71, %c0_72] : memref<1x4x256xf32, #tpu.memory_space<vmem>>, vector<1x4x256xf32>
    %128 = vector.shape_cast %127 : vector<1x4x256xf32> to vector<4x256xf32>
    %129 = vector.shape_cast %126 : vector<4x256xf32> to vector<1x4x256xf32>
    tpu.vector_store %arg6[%c0_70, %c0_71, %c0_72], %129 {strides = array<i32>} : memref<1x4x256xf32, #tpu.memory_space<vmem>>, vector<1x4x256xf32>,
    return
  }
  func.func @transform_0(%arg0: i32) -> (i32, i32, i32) {
    %c0_i32 = arith.constant 0 : i32
    %c0_i32_0 = arith.constant 0 : i32
    %c0_i32_1 = arith.constant 0 : i32
    return %arg0, %c0_i32, %c0_i32_0 : i32, i32, i32
  }
  func.func @transform_1(%arg0: i32) -> (i32, i32) {
    %c0_i32 = arith.constant 0 : i32
    %c0_i32_0 = arith.constant 0 : i32
    %c0_i32_1 = arith.constant 0 : i32
    return %c0_i32, %c0_i32_0 : i32, i32
  }
  func.func @transform_2(%arg0: i32) -> (i32, i32) {
    %c0_i32 = arith.constant 0 : i32
    %c0_i32_0 = arith.constant 0 : i32
    %c0_i32_1 = arith.constant 0 : i32
    return %c0_i32, %c0_i32_0 : i32, i32
  }
  func.func @transform_3(%arg0: i32) -> (i32, i32, i32) {
    %c0_i32 = arith.constant 0 : i32
    %c0_i32_0 = arith.constant 0 : i32
    %c0_i32_1 = arith.constant 0 : i32
    %c0_i32_2 = arith.constant 0 : i32
    return %c0_i32, %c0_i32_0, %c0_i32_1 : i32, i32, i32
  }
  func.func @transform_4(%arg0: i32) -> (i32, i32) {
    %c0_i32 = arith.constant 0 : i32
    %c0_i32_0 = arith.constant 0 : i32
    %c0_i32_1 = arith.constant 0 : i32
    return %c0_i32, %c0_i32_0 : i32, i32
  }
  func.func @transform_5(%arg0: i32) -> (i32, i32, i32) {
    %c0_i32 = arith.constant 0 : i32
    %c0_i32_0 = arith.constant 0 : i32
    %c0_i32_1 = arith.constant 0 : i32
    return %arg0, %c0_i32, %c0_i32_0 : i32, i32, i32
  }
}

</mosaic_0001>

<llo_original>
// kernel: tpu_custom_call.1
$region0: #{tpu_custom_call.1}
  #allocation0 [shape = 'u32[]', space=smem, size = 0x4, offset = 0x4, fixed_abs, tag = 'smem constant byte address 0x4 - core index']
  #allocation1 [shape = 'u32[144,128]{1,0:T(1,128)}', space=vmem, size = 0x12000, scoped, tag = 'internal scratch']
  #allocation2 [shape = 'f32[2,290]{1,0:T(2,128)}', space=vmem, size = 0xc00, scoped, tag = 'scratch operand']
  %s0 = inlined_call_operand.vmem [shape: f32[2,4,256], index: 0, kind: input, shape index: {}]
  %s1 = inlined_call_operand.vmem [shape: f32[2,4], index: 1, kind: input, shape index: {}]
  %s2 = inlined_call_operand.vmem [shape: f32[2,1], index: 2, kind: input, shape index: {}]
  %s3 = inlined_call_operand.vmem [shape: f32[9,4,2], index: 3, kind: input, shape index: {}]
  %s4 = inlined_call_operand.vmem [shape: f32[4,1], index: 4, kind: input, shape index: {}]
  %s5 = inlined_call_operand.hbm [shape: f32[2,4,256], index: 5, kind: output, shape index: {}]
  %s6 = sld [smem:[#allocation0]]
  $region53: #{tpu_custom_call.1} parent=0
    _
  %s8 = ssub.s32 1, %s6
  %s9 = scalar_select 0, %s8, %s6
  $region1: #{tpu_custom_call.1} parent=0
    #allocation3 [shape = 'u8[8192]{0}', space=vmem, size = 0x2000, scoped, tag = 'output window, operand 0']
    #allocation4 [shape = 's32[2]{0}', space=sflag, size = 0x8, scoped, tag = 'scoped memory for tpu_custom_call.1']
    %10 = vsyncpa [#allocation4], 0
    %s11 = scalar_lea.sflag [#allocation4], 1
    %12 = vsyncpa %s11, 0
    loop: start=0, step=1, limit=4
    $region2: #{tpu_custom_call.1} parent=1 // loop_pre_header
      _
    $region3: #{tpu_custom_call.1} parent=1 // loop_header
      %s14 = sphi 0, %s18
      %p15 = scmp.ge.s32.totalorder %s14, 4
      %s24 = sphi 0, %s26
      %s27 = sphi 0, %s24
      %s28 = sphi 0, %s27
      %s44 = sphi 0, %s28
      %s48 = sphi 0, %s48
      %s50 = sphi 0, %s48
      %s51 = sphi 0, %s50
      %s65 = sphi 0, %s51
      %s69 = sphi 0, %s69
      %s71 = sphi 0, %s69
      %s72 = sphi 0, %s71
      %s86 = sphi 0, %s72
      %s90 = sphi 0, %s90
      %s92 = sphi 0, %s90
      %s93 = sphi 0, %s92
      %s107 = sphi 0, %s93
      %s111 = sphi 0, %s111
      %s113 = sphi 0, %s111
      %s114 = sphi 0, %s113
      %s128 = sphi 0, %s114
      %s134 = sphi 0, %s136
      %s137 = sphi 0, %s134
      %s138 = sphi 0, %s137
      %s154 = sphi 0, %s138
    $region4: #{tpu_custom_call.1} parent=1 // loop_header_branch
      %17 = sbr.rel (%p15) target = $region8
    $region5: #{tpu_custom_call.1} parent=1 // loop_body
      %s19 = ssub.s32 %s14, 1
      %s20 = ssub.s32 %s14, 2
      %s21 = sadd.s32 %s14, 1
      %s22 = ssub.s32 %s14, %s21
      %p23 = scmp.eq.s32.totalorder %s22, 0
      %s25 = sadd.s32 %s24, 1
      %s26 = scalar_select %p23, %s24, %s25
      %p29 = pneg %p23
      %p30 = scmp.eq.s32.totalorder %s14, 1
      %p31 = por %p29, %p30
      %p32 = scmp.ne.s32.totalorder %s24, %s27
      %p33 = scmp.eq.s32.totalorder %s14, 0
      %p34 = por %p32, %p33
      %p35 = scmp.ne.s32.totalorder %s24, %s27
      %p36 = scmp.eq.s32.totalorder %s19, 1
      %p37 = por %p35, %p36
      %p38 = scmp.ne.s32.totalorder %s27, %s28
      %p39 = scmp.eq.s32.totalorder %s19, 0
      %p40 = por %p38, %p39
      %p41 = scmp.ne.s32.totalorder %s27, %s28
      %p42 = scmp.eq.s32.totalorder %s20, 1
      %p43 = por %p41, %p42
      %p45 = scmp.ne.s32.totalorder %s28, %s44
      %p46 = scmp.eq.s32.totalorder %s20, 0
      %p47 = por %p45, %p46
      %s49 = sadd.s32 %s48, 1
      %p52 = scmp.eq.s32.totalorder %s14, 1
      %p53 = scmp.ne.s32.totalorder %s48, %s50
      %p54 = scmp.eq.s32.totalorder %s14, 0
      %p55 = por %p53, %p54
      %p56 = scmp.ne.s32.totalorder %s48, %s50
      %p57 = scmp.eq.s32.totalorder %s19, 1
      %p58 = por %p56, %p57
      %p59 = scmp.ne.s32.totalorder %s50, %s51
      %p60 = scmp.eq.s32.totalorder %s19, 0
      %p61 = por %p59, %p60
      %p62 = scmp.ne.s32.totalorder %s50, %s51
      %p63 = scmp.eq.s32.totalorder %s20, 1
      %p64 = por %p62, %p63
      %p66 = scmp.ne.s32.totalorder %s51, %s65
      %p67 = scmp.eq.s32.totalorder %s20, 0
      %p68 = por %p66, %p67
      %s70 = sadd.s32 %s69, 1
      %p73 = scmp.eq.s32.totalorder %s14, 1
      %p74 = scmp.ne.s32.totalorder %s69, %s71
      %p75 = scmp.eq.s32.totalorder %s14, 0
      %p76 = por %p74, %p75
      %p77 = scmp.ne.s32.totalorder %s69, %s71
      %p78 = scmp.eq.s32.totalorder %s19, 1
      %p79 = por %p77, %p78
      %p80 = scmp.ne.s32.totalorder %s71, %s72
      %p81 = scmp.eq.s32.totalorder %s19, 0
      %p82 = por %p80, %p81
      %p83 = scmp.ne.s32.totalorder %s71, %s72
      %p84 = scmp.eq.s32.totalorder %s20, 1
      %p85 = por %p83, %p84
      %p87 = scmp.ne.s32.totalorder %s72, %s86
      %p88 = scmp.eq.s32.totalorder %s20, 0
      %p89 = por %p87, %p88
      %s91 = sadd.s32 %s90, 1
      %p94 = scmp.eq.s32.totalorder %s14, 1
      %p95 = scmp.ne.s32.totalorder %s90, %s92
      %p96 = scmp.eq.s32.totalorder %s14, 0
      %p97 = por %p95, %p96
      %p98 = scmp.ne.s32.totalorder %s90, %s92
      %p99 = scmp.eq.s32.totalorder %s19, 1
      %p100 = por %p98, %p99
      %p101 = scmp.ne.s32.totalorder %s92, %s93
      %p102 = scmp.eq.s32.totalorder %s19, 0
      %p103 = por %p101, %p102
      %p104 = scmp.ne.s32.totalorder %s92, %s93
      %p105 = scmp.eq.s32.totalorder %s20, 1
      %p106 = por %p104, %p105
      %p108 = scmp.ne.s32.totalorder %s93, %s107
      %p109 = scmp.eq.s32.totalorder %s20, 0
      %p110 = por %p108, %p109
      %s112 = sadd.s32 %s111, 1
      %p115 = scmp.eq.s32.totalorder %s14, 1
      %p116 = scmp.ne.s32.totalorder %s111, %s113
      %p117 = scmp.eq.s32.totalorder %s14, 0
      %p118 = por %p116, %p117
      %p119 = scmp.ne.s32.totalorder %s111, %s113
      %p120 = scmp.eq.s32.totalorder %s19, 1
      %p121 = por %p119, %p120
      %p122 = scmp.ne.s32.totalorder %s113, %s114
      %p123 = scmp.eq.s32.totalorder %s19, 0
      %p124 = por %p122, %p123
      %p125 = scmp.ne.s32.totalorder %s113, %s114
      %p126 = scmp.eq.s32.totalorder %s20, 1
      %p127 = por %p125, %p126
      %p129 = scmp.ne.s32.totalorder %s114, %s128
      %p130 = scmp.eq.s32.totalorder %s20, 0
      %p131 = por %p129, %p130
      %s132 = ssub.s32 %s14, %s21
      %p133 = scmp.eq.s32.totalorder %s132, 0
      %s135 = sadd.s32 %s134, 1
      %s136 = scalar_select %p133, %s134, %s135
      %p139 = pneg %p133
      %p140 = scmp.eq.s32.totalorder %s14, 1
      %p141 = por %p139, %p140
      %p142 = scmp.ne.s32.totalorder %s134, %s137
      %p143 = scmp.eq.s32.totalorder %s14, 0
      %p144 = por %p142, %p143
      %p145 = scmp.ne.s32.totalorder %s134, %s137
      %p146 = scmp.eq.s32.totalorder %s19, 1
      %p147 = por %p145, %p146
      %p148 = scmp.ne.s32.totalorder %s137, %s138
      %p149 = scmp.eq.s32.totalorder %s19, 0
      %p150 = por %p148, %p149
      %p151 = scmp.ne.s32.totalorder %s137, %s138
      %p152 = scmp.eq.s32.totalorder %s20, 1
      %p153 = por %p151, %p152
      %p155 = scmp.ne.s32.totalorder %s138, %s154
      %p156 = scmp.eq.s32.totalorder %s20, 0
      %p157 = por %p155, %p156
      %p158 = scmp.le.s32.totalorder 1, %s14
      %p159 = scmp.lt.s32.totalorder %s14, 3
      %p160 = pnand %p158, %p159
      %p161 = pneg %p160
      // Predicated region
      $region9: #{tpu_custom_call.1} parent=5 // pred_check
        _
      $region10: #{tpu_custom_call.1} parent=5 // pred_check_branch
        %163 = sbr.rel (%p160) target = $region12
      $region11: #{tpu_custom_call.1} parent=5 // pred_region
        %s164 = ssub.s32 %s14, 1
        // Predicated region
        $region13: #{tpu_custom_call.1} parent=11 // pred_check
          %p165 = pneg %p61
        $region14: #{tpu_custom_call.1} parent=11 // pred_check_branch
          %167 = sbr.rel (%p165) target = $region16
        $region15: #{tpu_custom_call.1} parent=11 // pred_region
          _
        $region16: #{tpu_custom_call.1} parent=11 // pred_fallthru
          _
        // Predicated region
        $region17: #{tpu_custom_call.1} parent=11 // pred_check
          %p168 = pneg %p82
        $region18: #{tpu_custom_call.1} parent=11 // pred_check_branch
          %170 = sbr.rel (%p168) target = $region20
        $region19: #{tpu_custom_call.1} parent=11 // pred_region
          _
        $region20: #{tpu_custom_call.1} parent=11 // pred_fallthru
          _
        // Predicated region
        $region21: #{tpu_custom_call.1} parent=11 // pred_check
          %p171 = pneg %p103
        $region22: #{tpu_custom_call.1} parent=11 // pred_check_branch
          %173 = sbr.rel (%p171) target = $region24
        $region23: #{tpu_custom_call.1} parent=11 // pred_region
          _
        $region24: #{tpu_custom_call.1} parent=11 // pred_fallthru
          _
        // Predicated region
        $region25: #{tpu_custom_call.1} parent=11 // pred_check
          %p174 = pneg %p124
        $region26: #{tpu_custom_call.1} parent=11 // pred_check_branch
          %176 = sbr.rel (%p174) target = $region28
        $region27: #{tpu_custom_call.1} parent=11 // pred_region
          _
        $region28: #{tpu_custom_call.1} parent=11 // pred_fallthru
          _
      $region12: #{tpu_custom_call.1} parent=5 // pred_fallthru
        _
      %p177 = scmp.lt.s32.totalorder %s14, 2
      // Predicated region
      $region29: #{tpu_custom_call.1} parent=5 // pred_check
        %p178 = pneg %p177
      $region30: #{tpu_custom_call.1} parent=5 // pred_check_branch
        %180 = sbr.rel (%p178) target = $region32
      $region31: #{tpu_custom_call.1} parent=5 // pred_region
        // Predicated region
        $region33: #{tpu_custom_call.1} parent=31 // pred_check
          %p181 = pneg %p34
        $region34: #{tpu_custom_call.1} parent=31 // pred_check_branch
          %183 = sbr.rel (%p181) target = $region36
        $region35: #{tpu_custom_call.1} parent=31 // pred_region
          %p184 = scmp.lt.s32.totalorder %s14, 1
          %s185 = scalar_select %p184, %s14, 1
          %s186 = smul.addr %s185, 2
          %s187 = smul.addr %s186, 4
          %s188 = scalar_lea.vmem %s0, %s187
        $region36: #{tpu_custom_call.1} parent=31 // pred_fallthru
          _
      $region32: #{tpu_custom_call.1} parent=5 // pred_fallthru
        _
      %p189 = scmp.le.s32.totalorder 1, %s14
      %p190 = scmp.lt.s32.totalorder %s14, 3
      %p191 = pnand %p189, %p190
      %p192 = pneg %p191
      // Predicated region
      $region37: #{tpu_custom_call.1} parent=5 // pred_check
        _
      $region38: #{tpu_custom_call.1} parent=5 // pred_check_branch
        %194 = sbr.rel (%p191) target = $region40
      $region39: #{tpu_custom_call.1} parent=5 // pred_region
        %s195 = ssub.s32 %s14, 1
        %p196 = scmp.lt.s32.totalorder %s19, 1
        %s197 = scalar_select %p196, %s19, 1
        %s198 = smul.addr %s197, 2
        %s199 = smul.addr %s198, 4
        %s200 = scalar_lea.vmem %s0, %s199
        %p201 = pneg %p40
        %p202 = pneg %p37
        %p203 = pneg %p61
        %p204 = pneg %p58
        %p205 = pneg %p82
        %p206 = pneg %p79
        %p207 = pneg %p103
        %p208 = pneg %p100
        %p209 = pneg %p124
        %p210 = pneg %p121
        %p211 = pneg %p150
        %p212 = pneg %p147
        %s213 = sand.u32 %s137, 1
        %s214 = scalar_lea.sflag [#allocation4], %s213
        %s215 = sand.u32 %s137, 1
        %s216 = smul.addr %s215, 8
        %s217 = scalar_lea.vmem [#allocation3], %s216
        %p218 = scmp.lt.s32.totalorder %s19, 1
        %s219 = scalar_select %p218, %s19, 1
        %s220 = smul.addr %s219, 2
        %s221 = smul.addr %s220, 4
        %s222 = scalar_lea.vmem %s0, %s221
        %v223 = vld [vmem:[%s222] sm:$0xff]
        %v224 = vld [vmem:[%s1] sm:$0x3]
        %v225 = vld [vmem:[%s2] sm:$0x3]
        %227 = vset.pattern.permute.xlu0 0
        %228 = vperm.xlu0 %227, %v225
        %v229 = vpop.permute.xlu0 %228
        %v232 = vcombine.high %v223, %v223
        %vm233 = vcmask 31744
        %v235 = vsel %vm233, %v224, 0
        %vm237 = vcmask 1043456
        %v238 = vsel %vm237, %v223, 0
        %v240 = vsel %vm237, %v232, 0
        %242 = vmatprep.subr.mxu0 %v240
        %243 = vmatpush1.msra.mxu0 %v238
        %244 = vmatprep.subr.mxu0 0.0
        %245 = vmatpush1.msra.mxu0 0.0
        %246 = vmatprep.subr.mxu0 0.0
        %247 = vmatpush1.msra.mxu0 0.0
        %248 = vmatprep.subr.mxu0 0.0
        %249 = vmatpush1.msra.mxu0 0.0
        %250 = vmatprep.subr.mxu0 0.0
        %251 = vmatpush1.msra.mxu0 0.0
        %252 = vmatprep.subr.mxu0 0.0
        %253 = vmatpush1.msra.mxu0 0.0
        %254 = vmatprep.subr.mxu0 0.0
        %255 = vmatpush1.msra.mxu0 0.0
        %256 = vmatprep.subr.mxu0 0.0
        %257 = vmatpush1.msra.mxu0 0.0
        %258 = vmatprep.subr.mxu0 0.0
        %259 = vmatpush1.msra.mxu0 0.0
        %260 = vmatprep.subr.mxu0 0.0
        %261 = vmatpush1.msra.mxu0 0.0
        %262 = vmatprep.subr.mxu0 0.0
        %263 = vmatpush1.msra.mxu0 0.0
        %264 = vmatprep.subr.mxu0 0.0
        %265 = vmatpush1.msra.mxu0 0.0
        %266 = vmatprep.subr.mxu0 0.0
        %267 = vmatpush1.msra.mxu0 0.0
        %268 = vmatprep.subr.mxu0 0.0
        %269 = vmatpush1.msra.mxu0 0.0
        %270 = vmatprep.subr.mxu0 0.0
        %271 = vmatpush1.msra.mxu0 0.0
        %272 = vmatprep.subr.mxu0 0.0
        %273 = vmatpush1.msra.mxu0 0.0
        %274 = vmatprep.subr.mxu0 0.0
        %275 = vmatpush1.msra.mxu0 0.0
        %276 = vmatprep.subr.mxu0 0.0
        %277 = vmatpush1.msra.mxu0 0.0
        %278 = vmatprep.subr.mxu0 0.0
        %279 = vmatpush1.msra.mxu0 0.0
        %280 = vmatprep.subr.mxu0 0.0
        %281 = vmatpush1.msra.mxu0 0.0
        %282 = vmatprep.subr.mxu0 0.0
        %283 = vmatpush1.msra.mxu0 0.0
        %284 = vmatprep.subr.mxu0 0.0
        %285 = vmatpush1.msra.mxu0 0.0
        %286 = vmatprep.subr.mxu0 0.0
        %287 = vmatpush1.msra.mxu0 0.0
        %288 = vmatprep.subr.mxu0 0.0
        %289 = vmatpush1.msra.mxu0 0.0
        %290 = vmatprep.subr.mxu0 0.0
        %291 = vmatpush1.msra.mxu0 0.0
        %292 = vmatprep.subr.mxu0 0.0
        %293 = vmatpush1.msra.mxu0 0.0
        %294 = vmatprep.subr.mxu0 0.0
        %295 = vmatpush1.msra.mxu0 0.0
        %296 = vmatprep.subr.mxu0 0.0
        %297 = vmatpush1.msra.mxu0 0.0
        %298 = vmatprep.subr.mxu0 0.0
        %299 = vmatpush1.msra.mxu0 0.0
        %300 = vmatprep.subr.mxu0 0.0
        %301 = vmatpush1.msra.mxu0 0.0
        %302 = vmatprep.subr.mxu0 0.0
        %303 = vmatpush1.msra.mxu0 0.0
        %304 = vmatprep.subr.mxu0 0.0
        %305 = vmatpush1.msra.mxu0 0.0
        %306 = vmatprep.mubr.f32.mxu0 0.0
        %307 = vmatmul.mubr.f32.gmra.mrb[0].mxu0 %v235
        %v308 = vpop.f32.mrb[0].mxu0
        %v309 = vadd.f32 %v229, %v308
        %v310 = vpop.f32.mrb[0].mxu0
        %v311 = vadd.f32 %v229, %v310
        %312 = vdwg.mxu0
        %v313 = vsub.f32 0.0, %v309
        %v314 = vsub.f32 0.0, %v311
        %v315 = vmul.f32 %v313, 1.442695
        %v316 = vpow.pop %v315
        %v317 = vmul.f32 %v314, 1.442695
        %v318 = vpow.pop %v317
        %v319 = vadd.f32 %v316, 1.0
        %v320 = vadd.f32 %v318, 1.0
        %v321 = vrcp.pop %v319
        %v322 = vmul.f32 1.0, %v321
        %v323 = vrcp.pop %v320
        %v324 = vmul.f32 1.0, %v323
        %v325 = vmul.f32 %v309, %v322
        %v326 = vmul.f32 %v311, %v324
        %vm327 = vcmask 1041408
        %vm328 = vcmask 1043458
        %vm329 = vmor %vm328, %vm327
        %vm330 = vcmask 275460
        %vm331 = vmor %vm330, %vm329
        %332 = vst.msk [vmem:[#allocation2] sm:$0x3f] %vm331, 0.0
        %v335 = vcombine.low %v325, %v326
        %v337 = vunpack.c.l.s4 1983009808
        %v338 = vunpack.c.0.s8 %v337
        %v339 = vlaneseq
        %v340 = vshrl.u32 %v339, 7
        %v341 = vsub.s32 %v338, %v340
        %v342 = vrot.slane %v335, %v341
        %343 = vrot.lane.b32.xlu0 %v342, 17
        %v344 = vpop.permute.xlu0 %343
        %v345 = vrot.slane %v344, 6
        %vm346 = vcmask 138240
        %v347 = vsel %vm346, %v345, %v344
        %vm349 = vcmask 1041544
        %vm350 = vmor %vm328, %vm349
        %vm351 = vcmask 136196
        %vm352 = vmor %vm351, %vm350
        %353 = vst.msk [vmem:[#allocation2] sm:$0x3f] %vm352, %v347
        %v354 = vlaneseq
        %v355 = vand.u32 %v354, 127
        %v356 = vadd.s32 %v355, 128
        %vm357 = vcmp.lt.s32.totalorder %v355, 0
        %v358 = vsub.s32 0, %v355
        %v359 = vsel %vm357, %v358, %v355
        %v360 = vshrl.u32 %v359, 4
        %v361 = vand.u32 %v359, 15
        %v362 = vsub.s32 0, %v361
        %v363 = vsel %vm357, %v362, %v361
        %vm364 = vcmp.lt.s32.totalorder %v356, 0
        %v365 = vsub.s32 0, %v356
        %v366 = vsel %vm364, %v365, %v356
        %v367 = vshrl.u32 %v366, 4
        %v368 = vand.u32 %v366, 15
        %v369 = vsub.s32 0, %v368
        %v370 = vsel %vm364, %v369, %v368
        %vm371 = vcmp.ne.s32.totalorder %v363, 0
        %vm372 = vcmp.ne.s32.totalorder %v370, 0
        %vm373 = vcmp.lt.s32.totalorder %v363, 0
        %vm374 = vcmp.lt.s32.totalorder %v370, 0
        %vm375 = vmand %vm373, %vm371
        %vm376 = vmand %vm374, %vm372
        %v377 = vadd.s32 %v363, 16
        %v378 = vadd.s32 %v370, 16
        %v379 = vsel %vm375, %v377, %v363
        %v380 = vsel %vm376, %v378, %v370
        %vm381 = vcmp.ne.s32.totalorder %v379, 0
        %vm382 = vcmp.ne.s32.totalorder %v380, 0
        %vm383 = vcmp.ne.s32.totalorder %v379, 15
        %vm384 = vcmp.ne.s32.totalorder %v380, 15
        %v385 = vld [vmem:[#allocation2] sm:$0xf]
        %v386 = vsel %vm381, 1, 0
        %v387 = vsel %vm382, 1, 0
        %vm388 = vcmp.eq.s32.totalorder %v386, 1
        %vm389 = vcmp.eq.s32.totalorder %v387, 1
        %v392 = vunpack.c.l.s4 1983009808
        %v393 = vunpack.c.0.s8 %v392
        %v394 = vlaneseq
        %v395 = vshrl.u32 %v394, 7
        %v396 = vsub.s32 %v393, %v395
        %v397 = vrot.slane %v385, %v396
        %v398 = vcombine.high %v397, %v397
        %v401 = vsel %vm388, %v397, 0.0
        %v402 = vsel %vm389, %v398, 0.0
        %v403 = vld [vmem:[%s3] sm:$0xf]
        %v404 = vld [vmem:[#allocation2] sm:$0x3f]
        %s405 = scalar_lea.vmem %s3, 4
        %v406 = vld [vmem:[%s405] sm:$0xf]
        %v408 = vcombine.high %v404, %v404
        %v410 = vunpack.c.l.s4 1983009808
        %v411 = vunpack.c.0.s8 %v410
        %v412 = vlaneseq
        %v413 = vshrl.u32 %v412, 7
        %v414 = vsub.s32 %v411, %v413
        %v415 = vrot.slane %v404, %v414
        %v417 = vunpack.c.l.s4 1983009808
        %v418 = vunpack.c.0.s8 %v417
        %v419 = vlaneseq
        %v420 = vshrl.u32 %v419, 7
        %v421 = vsub.s32 %v418, %v420
        %v422 = vrot.slane %v408, %v421
        %v423 = vcombine.high %v415, %v415
        %424 = vrot.lane.b32.xlu0 %v415, 127
        %v425 = vpop.permute.xlu0 %424
        %426 = vrot.lane.b32.xlu0 %v423, 127
        %v427 = vpop.permute.xlu0 %426
        %428 = vrot.lane.b32.xlu0 %v422, 127
        %v429 = vpop.permute.xlu0 %428
        %vm430 = vcmask 1039360
        %v431 = vsel %vm430, %v425, %v427
        %v432 = vsel %vm430, %v427, %v429
        %vm433 = vcmask 15360
        %v435 = vsel %vm433, %v406, 0
        %v437 = vsel %vm327, %v431, 0
        %v439 = vsel %vm327, %v432, 0
        %441 = vmatprep.subr.mxu0 %v439
        %442 = vmatpush1.msra.mxu0 %v437
        %443 = vmatprep.subr.mxu0 0.0
        %444 = vmatpush1.msra.mxu0 0.0
        %445 = vmatprep.subr.mxu0 0.0
        %446 = vmatpush1.msra.mxu0 0.0
        %447 = vmatprep.subr.mxu0 0.0
        %448 = vmatpush1.msra.mxu0 0.0
        %449 = vmatprep.subr.mxu0 0.0
        %450 = vmatpush1.msra.mxu0 0.0
        %451 = vmatprep.subr.mxu0 0.0
        %452 = vmatpush1.msra.mxu0 0.0
        %453 = vmatprep.subr.mxu0 0.0
        %454 = vmatpush1.msra.mxu0 0.0
        %455 = vmatprep.subr.mxu0 0.0
        %456 = vmatpush1.msra.mxu0 0.0
        %457 = vmatprep.subr.mxu0 0.0
        %458 = vmatpush1.msra.mxu0 0.0
        %459 = vmatprep.subr.mxu0 0.0
        %460 = vmatpush1.msra.mxu0 0.0
        %461 = vmatprep.subr.mxu0 0.0
        %462 = vmatpush1.msra.mxu0 0.0
        %463 = vmatprep.subr.mxu0 0.0
        %464 = vmatpush1.msra.mxu0 0.0
        %465 = vmatprep.subr.mxu0 0.0
        %466 = vmatpush1.msra.mxu0 0.0
        %467 = vmatprep.subr.mxu0 0.0
        %468 = vmatpush1.msra.mxu0 0.0
        %469 = vmatprep.subr.mxu0 0.0
        %470 = vmatpush1.msra.mxu0 0.0
        %471 = vmatprep.subr.mxu0 0.0
        %472 = vmatpush1.msra.mxu0 0.0
        %473 = vmatprep.subr.mxu0 0.0
        %474 = vmatpush1.msra.mxu0 0.0
        %475 = vmatprep.subr.mxu0 0.0
        %476 = vmatpush1.msra.mxu0 0.0
        %477 = vmatprep.subr.mxu0 0.0
        %478 = vmatpush1.msra.mxu0 0.0
        %479 = vmatprep.subr.mxu0 0.0
        %480 = vmatpush1.msra.mxu0 0.0
        %481 = vmatprep.subr.mxu0 0.0
        %482 = vmatpush1.msra.mxu0 0.0
        %483 = vmatprep.subr.mxu0 0.0
        %484 = vmatpush1.msra.mxu0 0.0
        %485 = vmatprep.subr.mxu0 0.0
        %486 = vmatpush1.msra.mxu0 0.0
        %487 = vmatprep.subr.mxu0 0.0
        %488 = vmatpush1.msra.mxu0 0.0
        %489 = vmatprep.subr.mxu0 0.0
        %490 = vmatpush1.msra.mxu0 0.0
        %491 = vmatprep.subr.mxu0 0.0
        %492 = vmatpush1.msra.mxu0 0.0
        %493 = vmatprep.subr.mxu0 0.0
        %494 = vmatpush1.msra.mxu0 0.0
        %495 = vmatprep.subr.mxu0 0.0
        %496 = vmatpush1.msra.mxu0 0.0
        %497 = vmatprep.subr.mxu0 0.0
        %498 = vmatpush1.msra.mxu0 0.0
        %499 = vmatprep.subr.mxu0 0.0
        %500 = vmatpush1.msra.mxu0 0.0
        %501 = vmatprep.subr.mxu0 0.0
        %502 = vmatpush1.msra.mxu0 0.0
        %503 = vmatprep.subr.mxu0 0.0
        %504 = vmatpush1.msra.mxu0 0.0
        %505 = vmatprep.mubr.f32.mxu0 0.0
        %506 = vmatmul.mubr.f32.gmra.mrb[0].mxu0 %v435
        %v507 = vpop.f32.mrb[0].mxu0
        %v508 = vadd.f32 0.0, %v507
        %v509 = vpop.f32.mrb[0].mxu0
        %v510 = vadd.f32 0.0, %v509
        %511 = vdwg.mxu0
        %v513 = vsel %vm433, %v403, 0
        %v516 = vsel %vm327, %v401, 0
        %v519 = vsel %vm327, %v402, 0
        %521 = vmatprep.subr.mxu0 %v519
        %522 = vmatpush1.msra.mxu0 %v516
        %523 = vmatprep.subr.mxu0 0.0
        %524 = vmatpush1.msra.mxu0 0.0
        %525 = vmatprep.subr.mxu0 0.0
        %526 = vmatpush1.msra.mxu0 0.0
        %527 = vmatprep.subr.mxu0 0.0
        %528 = vmatpush1.msra.mxu0 0.0
        %529 = vmatprep.subr.mxu0 0.0
        %530 = vmatpush1.msra.mxu0 0.0
        %531 = vmatprep.subr.mxu0 0.0
        %532 = vmatpush1.msra.mxu0 0.0
        %533 = vmatprep.subr.mxu0 0.0
        %534 = vmatpush1.msra.mxu0 0.0
        %535 = vmatprep.subr.mxu0 0.0
        %536 = vmatpush1.msra.mxu0 0.0
        %537 = vmatprep.subr.mxu0 0.0
        %538 = vmatpush1.msra.mxu0 0.0
        %539 = vmatprep.subr.mxu0 0.0
        %540 = vmatpush1.msra.mxu0 0.0
        %541 = vmatprep.subr.mxu0 0.0
        %542 = vmatpush1.msra.mxu0 0.0
        %543 = vmatprep.subr.mxu0 0.0
        %544 = vmatpush1.msra.mxu0 0.0
        %545 = vmatprep.subr.mxu0 0.0
        %546 = vmatpush1.msra.mxu0 0.0
        %547 = vmatprep.subr.mxu0 0.0
        %548 = vmatpush1.msra.mxu0 0.0
        %549 = vmatprep.subr.mxu0 0.0
        %550 = vmatpush1.msra.mxu0 0.0
        %551 = vmatprep.subr.mxu0 0.0
        %552 = vmatpush1.msra.mxu0 0.0
        %553 = vmatprep.subr.mxu0 0.0
        %554 = vmatpush1.msra.mxu0 0.0
        %555 = vmatprep.subr.mxu0 0.0
        %556 = vmatpush1.msra.mxu0 0.0
        %557 = vmatprep.subr.mxu0 0.0
        %558 = vmatpush1.msra.mxu0 0.0
        %559 = vmatprep.subr.mxu0 0.0
        %560 = vmatpush1.msra.mxu0 0.0
        %561 = vmatprep.subr.mxu0 0.0
        %562 = vmatpush1.msra.mxu0 0.0
        %563 = vmatprep.subr.mxu0 0.0
        %564 = vmatpush1.msra.mxu0 0.0
        %565 = vmatprep.subr.mxu0 0.0
        %566 = vmatpush1.msra.mxu0 0.0
        %567 = vmatprep.subr.mxu0 0.0
        %568 = vmatpush1.msra.mxu0 0.0
        %569 = vmatprep.subr.mxu0 0.0
        %570 = vmatpush1.msra.mxu0 0.0
        %571 = vmatprep.subr.mxu0 0.0
        %572 = vmatpush1.msra.mxu0 0.0
        %573 = vmatprep.subr.mxu0 0.0
        %574 = vmatpush1.msra.mxu0 0.0
        %575 = vmatprep.subr.mxu0 0.0
        %576 = vmatpush1.msra.mxu0 0.0
        %577 = vmatprep.subr.mxu0 0.0
        %578 = vmatpush1.msra.mxu0 0.0
        %579 = vmatprep.subr.mxu0 0.0
        %580 = vmatpush1.msra.mxu0 0.0
        %581 = vmatprep.subr.mxu0 0.0
        %582 = vmatpush1.msra.mxu0 0.0
        %583 = vmatprep.subr.mxu0 0.0
        %584 = vmatpush1.msra.mxu0 0.0
        %585 = vmatprep.mubr.f32.mxu0 0.0
        %586 = vmatmul.mubr.f32.gmra.mrb[0].mxu0 %v513
        %v587 = vpop.f32.mrb[0].mxu0
        %v588 = vadd.f32 %v508, %v587
        %v589 = vpop.f32.mrb[0].mxu0
        %v590 = vadd.f32 %v510, %v589
        %591 = vdwg.mxu0
        %v592 = vld [vmem:[#allocation2] sm:$0x3f]
        %v593 = vsel %vm383, 1, 0
        %v594 = vsel %vm384, 1, 0
        %vm595 = vcmp.eq.s32.totalorder %v593, 1
        %vm596 = vcmp.eq.s32.totalorder %v594, 1
        %v598 = vcombine.high %v592, %v592
        %v600 = vunpack.c.l.s4 1983009808
        %v601 = vunpack.c.0.s8 %v600
        %v602 = vlaneseq
        %v603 = vshrl.u32 %v602, 7
        %v604 = vsub.s32 %v601, %v603
        %v605 = vrot.slane %v592, %v604
        %v607 = vunpack.c.l.s4 1983009808
        %v608 = vunpack.c.0.s8 %v607
        %v609 = vlaneseq
        %v610 = vshrl.u32 %v609, 7
        %v611 = vsub.s32 %v608, %v610
        %v612 = vrot.slane %v598, %v611
        %v613 = vcombine.high %v605, %v605
        %614 = vrot.lane.b32.xlu0 %v605, 126
        %v615 = vpop.permute.xlu0 %614
        %616 = vrot.lane.b32.xlu0 %v613, 126
        %v617 = vpop.permute.xlu0 %616
        %618 = vrot.lane.b32.xlu0 %v612, 126
        %v619 = vpop.permute.xlu0 %618
        %vm620 = vcmask 1031168
        %v621 = vsel %vm620, %v615, %v617
        %v622 = vsel %vm620, %v617, %v619
        %v625 = vsel %vm595, %v621, 0.0
        %v626 = vsel %vm596, %v622, 0.0
        %s627 = scalar_lea.vmem %s3, 8
        %v628 = vld [vmem:[%s627] sm:$0xf]
        %v630 = vsel %vm433, %v628, 0
        %v633 = vsel %vm327, %v625, 0
        %v636 = vsel %vm327, %v626, 0
        %638 = vmatprep.subr.mxu0 %v636
        %639 = vmatpush1.msra.mxu0 %v633
        %640 = vmatprep.subr.mxu0 0.0
        %641 = vmatpush1.msra.mxu0 0.0
        %642 = vmatprep.subr.mxu0 0.0
        %643 = vmatpush1.msra.mxu0 0.0
        %644 = vmatprep.subr.mxu0 0.0
        %645 = vmatpush1.msra.mxu0 0.0
        %646 = vmatprep.subr.mxu0 0.0
        %647 = vmatpush1.msra.mxu0 0.0
        %648 = vmatprep.subr.mxu0 0.0
        %649 = vmatpush1.msra.mxu0 0.0
        %650 = vmatprep.subr.mxu0 0.0
        %651 = vmatpush1.msra.mxu0 0.0
        %652 = vmatprep.subr.mxu0 0.0
        %653 = vmatpush1.msra.mxu0 0.0
        %654 = vmatprep.subr.mxu0 0.0
        %655 = vmatpush1.msra.mxu0 0.0
        %656 = vmatprep.subr.mxu0 0.0
        %657 = vmatpush1.msra.mxu0 0.0
        %658 = vmatprep.subr.mxu0 0.0
        %659 = vmatpush1.msra.mxu0 0.0
        %660 = vmatprep.subr.mxu0 0.0
        %661 = vmatpush1.msra.mxu0 0.0
        %662 = vmatprep.subr.mxu0 0.0
        %663 = vmatpush1.msra.mxu0 0.0
        %664 = vmatprep.subr.mxu0 0.0
        %665 = vmatpush1.msra.mxu0 0.0
        %666 = vmatprep.subr.mxu0 0.0
        %667 = vmatpush1.msra.mxu0 0.0
        %668 = vmatprep.subr.mxu0 0.0
        %669 = vmatpush1.msra.mxu0 0.0
        %670 = vmatprep.subr.mxu0 0.0
        %671 = vmatpush1.msra.mxu0 0.0
        %672 = vmatprep.subr.mxu0 0.0
        %673 = vmatpush1.msra.mxu0 0.0
        %674 = vmatprep.subr.mxu0 0.0
        %675 = vmatpush1.msra.mxu0 0.0
        %676 = vmatprep.subr.mxu0 0.0
        %677 = vmatpush1.msra.mxu0 0.0
        %678 = vmatprep.subr.mxu0 0.0
        %679 = vmatpush1.msra.mxu0 0.0
        %680 = vmatprep.subr.mxu0 0.0
        %681 = vmatpush1.msra.mxu0 0.0
        %682 = vmatprep.subr.mxu0 0.0
        %683 = vmatpush1.msra.mxu0 0.0
        %684 = vmatprep.subr.mxu0 0.0
        %685 = vmatpush1.msra.mxu0 0.0
        %686 = vmatprep.subr.mxu0 0.0
        %687 = vmatpush1.msra.mxu0 0.0
        %688 = vmatprep.subr.mxu0 0.0
        %689 = vmatpush1.msra.mxu0 0.0
        %690 = vmatprep.subr.mxu0 0.0
        %691 = vmatpush1.msra.mxu0 0.0
        %692 = vmatprep.subr.mxu0 0.0
        %693 = vmatpush1.msra.mxu0 0.0
        %694 = vmatprep.subr.mxu0 0.0
        %695 = vmatpush1.msra.mxu0 0.0
        %696 = vmatprep.subr.mxu0 0.0
        %697 = vmatpush1.msra.mxu0 0.0
        %698 = vmatprep.subr.mxu0 0.0
        %699 = vmatpush1.msra.mxu0 0.0
        %700 = vmatprep.subr.mxu0 0.0
        %701 = vmatpush1.msra.mxu0 0.0
        %702 = vmatprep.mubr.f32.mxu0 0.0
        %703 = vmatmul.mubr.f32.gmra.mrb[0].mxu0 %v630
        %v704 = vpop.f32.mrb[0].mxu0
        %v705 = vadd.f32 0.0, %v704
        %v706 = vpop.f32.mrb[0].mxu0
        %v707 = vadd.f32 0.0, %v706
        %708 = vdwg.mxu0
        %v709 = vadd.f32 %v588, %v705
        %v710 = vadd.f32 %v590, %v707
        %v711 = vld [vmem:[#allocation2] sm:$0x3f]
        %v713 = vcombine.high %v711, %v711
        %v715 = vunpack.c.l.s4 1983009808
        %v716 = vunpack.c.0.s8 %v715
        %v717 = vlaneseq
        %v718 = vshrl.u32 %v717, 7
        %v719 = vsub.s32 %v716, %v718
        %v720 = vrot.slane %v711, %v719
        %v722 = vunpack.c.l.s4 1983009808
        %v723 = vunpack.c.0.s8 %v722
        %v724 = vlaneseq
        %v725 = vshrl.u32 %v724, 7
        %v726 = vsub.s32 %v723, %v725
        %v727 = vrot.slane %v713, %v726
        %v728 = vcombine.high %v720, %v720
        %729 = vrot.lane.b32.xlu0 %v720, 112
        %v730 = vpop.permute.xlu0 %729
        %731 = vrot.lane.b32.xlu0 %v728, 112
        %v732 = vpop.permute.xlu0 %731
        %733 = vrot.lane.b32.xlu0 %v727, 112
        %v734 = vpop.permute.xlu0 %733
        %vm735 = vcmask 916480
        %v736 = vsel %vm735, %v730, %v732
        %v737 = vsel %vm735, %v732, %v734
        %v740 = vsel %vm388, %v736, 0.0
        %v741 = vsel %vm389, %v737, 0.0
        %s742 = scalar_lea.vmem %s3, 12
        %v743 = vld [vmem:[%s742] sm:$0xf]
        %v745 = vsel %vm433, %v743, 0
        %v748 = vsel %vm327, %v740, 0
        %v751 = vsel %vm327, %v741, 0
        %753 = vmatprep.subr.mxu0 %v751
        %754 = vmatpush1.msra.mxu0 %v748
        %755 = vmatprep.subr.mxu0 0.0
        %756 = vmatpush1.msra.mxu0 0.0
        %757 = vmatprep.subr.mxu0 0.0
        %758 = vmatpush1.msra.mxu0 0.0
        %759 = vmatprep.subr.mxu0 0.0
        %760 = vmatpush1.msra.mxu0 0.0
        %761 = vmatprep.subr.mxu0 0.0
        %762 = vmatpush1.msra.mxu0 0.0
        %763 = vmatprep.subr.mxu0 0.0
        %764 = vmatpush1.msra.mxu0 0.0
        %765 = vmatprep.subr.mxu0 0.0
        %766 = vmatpush1.msra.mxu0 0.0
        %767 = vmatprep.subr.mxu0 0.0
        %768 = vmatpush1.msra.mxu0 0.0
        %769 = vmatprep.subr.mxu0 0.0
        %770 = vmatpush1.msra.mxu0 0.0
        %771 = vmatprep.subr.mxu0 0.0
        %772 = vmatpush1.msra.mxu0 0.0
        %773 = vmatprep.subr.mxu0 0.0
        %774 = vmatpush1.msra.mxu0 0.0
        %775 = vmatprep.subr.mxu0 0.0
        %776 = vmatpush1.msra.mxu0 0.0
        %777 = vmatprep.subr.mxu0 0.0
        %778 = vmatpush1.msra.mxu0 0.0
        %779 = vmatprep.subr.mxu0 0.0
        %780 = vmatpush1.msra.mxu0 0.0
        %781 = vmatprep.subr.mxu0 0.0
        %782 = vmatpush1.msra.mxu0 0.0
        %783 = vmatprep.subr.mxu0 0.0
        %784 = vmatpush1.msra.mxu0 0.0
        %785 = vmatprep.subr.mxu0 0.0
        %786 = vmatpush1.msra.mxu0 0.0
        %787 = vmatprep.subr.mxu0 0.0
        %788 = vmatpush1.msra.mxu0 0.0
        %789 = vmatprep.subr.mxu0 0.0
        %790 = vmatpush1.msra.mxu0 0.0
        %791 = vmatprep.subr.mxu0 0.0
        %792 = vmatpush1.msra.mxu0 0.0
        %793 = vmatprep.subr.mxu0 0.0
        %794 = vmatpush1.msra.mxu0 0.0
        %795 = vmatprep.subr.mxu0 0.0
        %796 = vmatpush1.msra.mxu0 0.0
        %797 = vmatprep.subr.mxu0 0.0
        %798 = vmatpush1.msra.mxu0 0.0
        %799 = vmatprep.subr.mxu0 0.0
        %800 = vmatpush1.msra.mxu0 0.0
        %801 = vmatprep.subr.mxu0 0.0
        %802 = vmatpush1.msra.mxu0 0.0
        %803 = vmatprep.subr.mxu0 0.0
        %804 = vmatpush1.msra.mxu0 0.0
        %805 = vmatprep.subr.mxu0 0.0
        %806 = vmatpush1.msra.mxu0 0.0
        %807 = vmatprep.subr.mxu0 0.0
        %808 = vmatpush1.msra.mxu0 0.0
        %809 = vmatprep.subr.mxu0 0.0
        %810 = vmatpush1.msra.mxu0 0.0
        %811 = vmatprep.subr.mxu0 0.0
        %812 = vmatpush1.msra.mxu0 0.0
        %813 = vmatprep.subr.mxu0 0.0
        %814 = vmatpush1.msra.mxu0 0.0
        %815 = vmatprep.subr.mxu0 0.0
        %816 = vmatpush1.msra.mxu0 0.0
        %817 = vmatprep.mubr.f32.mxu0 0.0
        %818 = vmatmul.mubr.f32.gmra.mrb[0].mxu0 %v745
        %v819 = vpop.f32.mrb[0].mxu0
        %v820 = vadd.f32 0.0, %v819
        %v821 = vpop.f32.mrb[0].mxu0
        %v822 = vadd.f32 0.0, %v821
        %823 = vdwg.mxu0
        %v824 = vadd.f32 %v709, %v820
        %v825 = vadd.f32 %v710, %v822
        %v826 = vld [vmem:[#allocation2] sm:$0x3f]
        %s827 = scalar_lea.vmem %s3, 16
        %v828 = vld [vmem:[%s827] sm:$0xf]
        %v830 = vcombine.high %v826, %v826
        %v832 = vunpack.c.l.s4 1983009808
        %v833 = vunpack.c.0.s8 %v832
        %v834 = vlaneseq
        %v835 = vshrl.u32 %v834, 7
        %v836 = vsub.s32 %v833, %v835
        %v837 = vrot.slane %v826, %v836
        %v839 = vunpack.c.l.s4 1983009808
        %v840 = vunpack.c.0.s8 %v839
        %v841 = vlaneseq
        %v842 = vshrl.u32 %v841, 7
        %v843 = vsub.s32 %v840, %v842
        %v844 = vrot.slane %v830, %v843
        %v845 = vcombine.high %v837, %v837
        %846 = vrot.lane.b32.xlu0 %v837, 111
        %v847 = vpop.permute.xlu0 %846
        %848 = vrot.lane.b32.xlu0 %v845, 111
        %v849 = vpop.permute.xlu0 %848
        %850 = vrot.lane.b32.xlu0 %v844, 111
        %v851 = vpop.permute.xlu0 %850
        %vm852 = vcmask 908288
        %v853 = vsel %vm852, %v847, %v849
        %v854 = vsel %vm852, %v849, %v851
        %v856 = vsel %vm433, %v828, 0
        %v858 = vsel %vm327, %v853, 0
        %v860 = vsel %vm327, %v854, 0
        %862 = vmatprep.subr.mxu0 %v860
        %863 = vmatpush1.msra.mxu0 %v858
        %864 = vmatprep.subr.mxu0 0.0
        %865 = vmatpush1.msra.mxu0 0.0
        %866 = vmatprep.subr.mxu0 0.0
        %867 = vmatpush1.msra.mxu0 0.0
        %868 = vmatprep.subr.mxu0 0.0
        %869 = vmatpush1.msra.mxu0 0.0
        %870 = vmatprep.subr.mxu0 0.0
        %871 = vmatpush1.msra.mxu0 0.0
        %872 = vmatprep.subr.mxu0 0.0
        %873 = vmatpush1.msra.mxu0 0.0
        %874 = vmatprep.subr.mxu0 0.0
        %875 = vmatpush1.msra.mxu0 0.0
        %876 = vmatprep.subr.mxu0 0.0
        %877 = vmatpush1.msra.mxu0 0.0
        %878 = vmatprep.subr.mxu0 0.0
        %879 = vmatpush1.msra.mxu0 0.0
        %880 = vmatprep.subr.mxu0 0.0
        %881 = vmatpush1.msra.mxu0 0.0
        %882 = vmatprep.subr.mxu0 0.0
        %883 = vmatpush1.msra.mxu0 0.0
        %884 = vmatprep.subr.mxu0 0.0
        %885 = vmatpush1.msra.mxu0 0.0
        %886 = vmatprep.subr.mxu0 0.0
        %887 = vmatpush1.msra.mxu0 0.0
        %888 = vmatprep.subr.mxu0 0.0
        %889 = vmatpush1.msra.mxu0 0.0
        %890 = vmatprep.subr.mxu0 0.0
        %891 = vmatpush1.msra.mxu0 0.0
        %892 = vmatprep.subr.mxu0 0.0
        %893 = vmatpush1.msra.mxu0 0.0
        %894 = vmatprep.subr.mxu0 0.0
        %895 = vmatpush1.msra.mxu0 0.0
        %896 = vmatprep.subr.mxu0 0.0
        %897 = vmatpush1.msra.mxu0 0.0
        %898 = vmatprep.subr.mxu0 0.0
        %899 = vmatpush1.msra.mxu0 0.0
        %900 = vmatprep.subr.mxu0 0.0
        %901 = vmatpush1.msra.mxu0 0.0
        %902 = vmatprep.subr.mxu0 0.0
        %903 = vmatpush1.msra.mxu0 0.0
        %904 = vmatprep.subr.mxu0 0.0
        %905 = vmatpush1.msra.mxu0 0.0
        %906 = vmatprep.subr.mxu0 0.0
        %907 = vmatpush1.msra.mxu0 0.0
        %908 = vmatprep.subr.mxu0 0.0
        %909 = vmatpush1.msra.mxu0 0.0
        %910 = vmatprep.subr.mxu0 0.0
        %911 = vmatpush1.msra.mxu0 0.0
        %912 = vmatprep.subr.mxu0 0.0
        %913 = vmatpush1.msra.mxu0 0.0
        %914 = vmatprep.subr.mxu0 0.0
        %915 = vmatpush1.msra.mxu0 0.0
        %916 = vmatprep.subr.mxu0 0.0
        %917 = vmatpush1.msra.mxu0 0.0
        %918 = vmatprep.subr.mxu0 0.0
        %919 = vmatpush1.msra.mxu0 0.0
        %920 = vmatprep.subr.mxu0 0.0
        %921 = vmatpush1.msra.mxu0 0.0
        %922 = vmatprep.subr.mxu0 0.0
        %923 = vmatpush1.msra.mxu0 0.0
        %924 = vmatprep.subr.mxu0 0.0
        %925 = vmatpush1.msra.mxu0 0.0
        %926 = vmatprep.mubr.f32.mxu0 0.0
        %927 = vmatmul.mubr.f32.gmra.mrb[0].mxu0 %v856
        %v928 = vpop.f32.mrb[0].mxu0
        %v929 = vadd.f32 0.0, %v928
        %v930 = vpop.f32.mrb[0].mxu0
        %v931 = vadd.f32 0.0, %v930
        %932 = vdwg.mxu0
        %v933 = vadd.f32 %v824, %v929
        %v934 = vadd.f32 %v825, %v931
        %v935 = vld [vmem:[#allocation2] sm:$0x3f]
        %v937 = vcombine.high %v935, %v935
        %v939 = vunpack.c.l.s4 1983009808
        %v940 = vunpack.c.0.s8 %v939
        %v941 = vlaneseq
        %v942 = vshrl.u32 %v941, 7
        %v943 = vsub.s32 %v940, %v942
        %v944 = vrot.slane %v935, %v943
        %v946 = vunpack.c.l.s4 1983009808
        %v947 = vunpack.c.0.s8 %v946
        %v948 = vlaneseq
        %v949 = vshrl.u32 %v948, 7
        %v950 = vsub.s32 %v947, %v949
        %v951 = vrot.slane %v937, %v950
        %v952 = vcombine.high %v944, %v944
        %953 = vrot.lane.b32.xlu0 %v944, 110
        %v954 = vpop.permute.xlu0 %953
        %955 = vrot.lane.b32.xlu0 %v952, 110
        %v956 = vpop.permute.xlu0 %955
        %957 = vrot.lane.b32.xlu0 %v951, 110
        %v958 = vpop.permute.xlu0 %957
        %vm959 = vcmask 900096
        %v960 = vsel %vm959, %v954, %v956
        %v961 = vsel %vm959, %v956, %v958
        %v964 = vsel %vm595, %v960, 0.0
        %v965 = vsel %vm596, %v961, 0.0
        %s966 = scalar_lea.vmem %s3, 20
        %v967 = vld [vmem:[%s966] sm:$0xf]
        %v969 = vsel %vm433, %v967, 0
        %v972 = vsel %vm327, %v964, 0
        %v975 = vsel %vm327, %v965, 0
        %977 = vmatprep.subr.mxu0 %v975
        %978 = vmatpush1.msra.mxu0 %v972
        %979 = vmatprep.subr.mxu0 0.0
        %980 = vmatpush1.msra.mxu0 0.0
        %981 = vmatprep.subr.mxu0 0.0
        %982 = vmatpush1.msra.mxu0 0.0
        %983 = vmatprep.subr.mxu0 0.0
        %984 = vmatpush1.msra.mxu0 0.0
        %985 = vmatprep.subr.mxu0 0.0
        %986 = vmatpush1.msra.mxu0 0.0
        %987 = vmatprep.subr.mxu0 0.0
        %988 = vmatpush1.msra.mxu0 0.0
        %989 = vmatprep.subr.mxu0 0.0
        %990 = vmatpush1.msra.mxu0 0.0
        %991 = vmatprep.subr.mxu0 0.0
        %992 = vmatpush1.msra.mxu0 0.0
        %993 = vmatprep.subr.mxu0 0.0
        %994 = vmatpush1.msra.mxu0 0.0
        %995 = vmatprep.subr.mxu0 0.0
        %996 = vmatpush1.msra.mxu0 0.0
        %997 = vmatprep.subr.mxu0 0.0
        %998 = vmatpush1.msra.mxu0 0.0
        %999 = vmatprep.subr.mxu0 0.0
        %1000 = vmatpush1.msra.mxu0 0.0
        %1001 = vmatprep.subr.mxu0 0.0
        %1002 = vmatpush1.msra.mxu0 0.0
        %1003 = vmatprep.subr.mxu0 0.0
        %1004 = vmatpush1.msra.mxu0 0.0
        %1005 = vmatprep.subr.mxu0 0.0
        %1006 = vmatpush1.msra.mxu0 0.0
        %1007 = vmatprep.subr.mxu0 0.0
        %1008 = vmatpush1.msra.mxu0 0.0
        %1009 = vmatprep.subr.mxu0 0.0
        %1010 = vmatpush1.msra.mxu0 0.0
        %1011 = vmatprep.subr.mxu0 0.0
        %1012 = vmatpush1.msra.mxu0 0.0
        %1013 = vmatprep.subr.mxu0 0.0
        %1014 = vmatpush1.msra.mxu0 0.0
        %1015 = vmatprep.subr.mxu0 0.0
        %1016 = vmatpush1.msra.mxu0 0.0
        %1017 = vmatprep.subr.mxu0 0.0
        %1018 = vmatpush1.msra.mxu0 0.0
        %1019 = vmatprep.subr.mxu0 0.0
        %1020 = vmatpush1.msra.mxu0 0.0
        %1021 = vmatprep.subr.mxu0 0.0
        %1022 = vmatpush1.msra.mxu0 0.0
        %1023 = vmatprep.subr.mxu0 0.0
        %1024 = vmatpush1.msra.mxu0 0.0
        %1025 = vmatprep.subr.mxu0 0.0
        %1026 = vmatpush1.msra.mxu0 0.0
        %1027 = vmatprep.subr.mxu0 0.0
        %1028 = vmatpush1.msra.mxu0 0.0
        %1029 = vmatprep.subr.mxu0 0.0
        %1030 = vmatpush1.msra.mxu0 0.0
        %1031 = vmatprep.subr.mxu0 0.0
        %1032 = vmatpush1.msra.mxu0 0.0
        %1033 = vmatprep.subr.mxu0 0.0
        %1034 = vmatpush1.msra.mxu0 0.0
        %1035 = vmatprep.subr.mxu0 0.0
        %1036 = vmatpush1.msra.mxu0 0.0
        %1037 = vmatprep.subr.mxu0 0.0
        %1038 = vmatpush1.msra.mxu0 0.0
        %1039 = vmatprep.subr.mxu0 0.0
        %1040 = vmatpush1.msra.mxu0 0.0
        %1041 = vmatprep.mubr.f32.mxu0 0.0
        %1042 = vmatmul.mubr.f32.gmra.mrb[0].mxu0 %v969
        %v1043 = vpop.f32.mrb[0].mxu0
        %v1044 = vadd.f32 0.0, %v1043
        %v1045 = vpop.f32.mrb[0].mxu0
        %v1046 = vadd.f32 0.0, %v1045
        %1047 = vdwg.mxu0
        %v1048 = vadd.f32 %v933, %v1044
        %v1049 = vadd.f32 %v934, %v1046
        %v1050 = vld [vmem:[#allocation2] sm:$0x3f]
        %v1052 = vcombine.high %v1050, %v1050
        %v1054 = vunpack.c.l.s4 1983009808
        %v1055 = vunpack.c.0.s8 %v1054
        %v1056 = vlaneseq
        %v1057 = vshrl.u32 %v1056, 7
        %v1058 = vsub.s32 %v1055, %v1057
        %v1059 = vrot.slane %v1050, %v1058
        %v1061 = vunpack.c.l.s4 1983009808
        %v1062 = vunpack.c.0.s8 %v1061
        %v1063 = vlaneseq
        %v1064 = vshrl.u32 %v1063, 7
        %v1065 = vsub.s32 %v1062, %v1064
        %v1066 = vrot.slane %v1052, %v1065
        %v1067 = vcombine.high %v1059, %v1059
        %1068 = vrot.lane.b32.xlu0 %v1059, 96
        %v1069 = vpop.permute.xlu0 %1068
        %1070 = vrot.lane.b32.xlu0 %v1067, 96
        %v1071 = vpop.permute.xlu0 %1070
        %1072 = vrot.lane.b32.xlu0 %v1066, 96
        %v1073 = vpop.permute.xlu0 %1072
        %vm1074 = vcmask 785408
        %v1075 = vsel %vm1074, %v1069, %v1071
        %v1076 = vsel %vm1074, %v1071, %v1073
        %v1079 = vsel %vm388, %v1075, 0.0
        %v1080 = vsel %vm389, %v1076, 0.0
        %s1081 = scalar_lea.vmem %s3, 24
        %v1082 = vld [vmem:[%s1081] sm:$0xf]
        %v1084 = vsel %vm433, %v1082, 0
        %v1087 = vsel %vm327, %v1079, 0
        %v1090 = vsel %vm327, %v1080, 0
        %1092 = vmatprep.subr.mxu0 %v1090
        %1093 = vmatpush1.msra.mxu0 %v1087
        %1094 = vmatprep.subr.mxu0 0.0
        %1095 = vmatpush1.msra.mxu0 0.0
        %1096 = vmatprep.subr.mxu0 0.0
        %1097 = vmatpush1.msra.mxu0 0.0
        %1098 = vmatprep.subr.mxu0 0.0
        %1099 = vmatpush1.msra.mxu0 0.0
        %1100 = vmatprep.subr.mxu0 0.0
        %1101 = vmatpush1.msra.mxu0 0.0
        %1102 = vmatprep.subr.mxu0 0.0
        %1103 = vmatpush1.msra.mxu0 0.0
        %1104 = vmatprep.subr.mxu0 0.0
        %1105 = vmatpush1.msra.mxu0 0.0
        %1106 = vmatprep.subr.mxu0 0.0
        %1107 = vmatpush1.msra.mxu0 0.0
        %1108 = vmatprep.subr.mxu0 0.0
        %1109 = vmatpush1.msra.mxu0 0.0
        %1110 = vmatprep.subr.mxu0 0.0
        %1111 = vmatpush1.msra.mxu0 0.0
        %1112 = vmatprep.subr.mxu0 0.0
        %1113 = vmatpush1.msra.mxu0 0.0
        %1114 = vmatprep.subr.mxu0 0.0
        %1115 = vmatpush1.msra.mxu0 0.0
        %1116 = vmatprep.subr.mxu0 0.0
        %1117 = vmatpush1.msra.mxu0 0.0
        %1118 = vmatprep.subr.mxu0 0.0
        %1119 = vmatpush1.msra.mxu0 0.0
        %1120 = vmatprep.subr.mxu0 0.0
        %1121 = vmatpush1.msra.mxu0 0.0
        %1122 = vmatprep.subr.mxu0 0.0
        %1123 = vmatpush1.msra.mxu0 0.0
        %1124 = vmatprep.subr.mxu0 0.0
        %1125 = vmatpush1.msra.mxu0 0.0
        %1126 = vmatprep.subr.mxu0 0.0
        %1127 = vmatpush1.msra.mxu0 0.0
        %1128 = vmatprep.subr.mxu0 0.0
        %1129 = vmatpush1.msra.mxu0 0.0
        %1130 = vmatprep.subr.mxu0 0.0
        %1131 = vmatpush1.msra.mxu0 0.0
        %1132 = vmatprep.subr.mxu0 0.0
        %1133 = vmatpush1.msra.mxu0 0.0
        %1134 = vmatprep.subr.mxu0 0.0
        %1135 = vmatpush1.msra.mxu0 0.0
        %1136 = vmatprep.subr.mxu0 0.0
        %1137 = vmatpush1.msra.mxu0 0.0
        %1138 = vmatprep.subr.mxu0 0.0
        %1139 = vmatpush1.msra.mxu0 0.0
        %1140 = vmatprep.subr.mxu0 0.0
        %1141 = vmatpush1.msra.mxu0 0.0
        %1142 = vmatprep.subr.mxu0 0.0
        %1143 = vmatpush1.msra.mxu0 0.0
        %1144 = vmatprep.subr.mxu0 0.0
        %1145 = vmatpush1.msra.mxu0 0.0
        %1146 = vmatprep.subr.mxu0 0.0
        %1147 = vmatpush1.msra.mxu0 0.0
        %1148 = vmatprep.subr.mxu0 0.0
        %1149 = vmatpush1.msra.mxu0 0.0
        %1150 = vmatprep.subr.mxu0 0.0
        %1151 = vmatpush1.msra.mxu0 0.0
        %1152 = vmatprep.subr.mxu0 0.0
        %1153 = vmatpush1.msra.mxu0 0.0
        %1154 = vmatprep.subr.mxu0 0.0
        %1155 = vmatpush1.msra.mxu0 0.0
        %1156 = vmatprep.mubr.f32.mxu0 0.0
        %1157 = vmatmul.mubr.f32.gmra.mrb[0].mxu0 %v1084
        %v1158 = vpop.f32.mrb[0].mxu0
        %v1159 = vadd.f32 0.0, %v1158
        %v1160 = vpop.f32.mrb[0].mxu0
        %v1161 = vadd.f32 0.0, %v1160
        %1162 = vdwg.mxu0
        %v1163 = vadd.f32 %v1048, %v1159
        %v1164 = vadd.f32 %v1049, %v1161
        %v1165 = vld [vmem:[#allocation2] sm:$0x3f]
        %s1166 = scalar_lea.vmem %s3, 28
        %v1167 = vld [vmem:[%s1166] sm:$0xf]
        %v1169 = vcombine.high %v1165, %v1165
        %v1171 = vunpack.c.l.s4 1983009808
        %v1172 = vunpack.c.0.s8 %v1171
        %v1173 = vlaneseq
        %v1174 = vshrl.u32 %v1173, 7
        %v1175 = vsub.s32 %v1172, %v1174
        %v1176 = vrot.slane %v1165, %v1175
        %v1178 = vunpack.c.l.s4 1983009808
        %v1179 = vunpack.c.0.s8 %v1178
        %v1180 = vlaneseq
        %v1181 = vshrl.u32 %v1180, 7
        %v1182 = vsub.s32 %v1179, %v1181
        %v1183 = vrot.slane %v1169, %v1182
        %v1184 = vcombine.high %v1176, %v1176
        %1185 = vrot.lane.b32.xlu0 %v1176, 95
        %v1186 = vpop.permute.xlu0 %1185
        %1187 = vrot.lane.b32.xlu0 %v1184, 95
        %v1188 = vpop.permute.xlu0 %1187
        %1189 = vrot.lane.b32.xlu0 %v1183, 95
        %v1190 = vpop.permute.xlu0 %1189
        %vm1191 = vcmask 777216
        %v1192 = vsel %vm1191, %v1186, %v1188
        %v1193 = vsel %vm1191, %v1188, %v1190
        %v1195 = vsel %vm433, %v1167, 0
        %v1197 = vsel %vm327, %v1192, 0
        %v1199 = vsel %vm327, %v1193, 0
        %1201 = vmatprep.subr.mxu0 %v1199
        %1202 = vmatpush1.msra.mxu0 %v1197
        %1203 = vmatprep.subr.mxu0 0.0
        %1204 = vmatpush1.msra.mxu0 0.0
        %1205 = vmatprep.subr.mxu0 0.0
        %1206 = vmatpush1.msra.mxu0 0.0
        %1207 = vmatprep.subr.mxu0 0.0
        %1208 = vmatpush1.msra.mxu0 0.0
        %1209 = vmatprep.subr.mxu0 0.0
        %1210 = vmatpush1.msra.mxu0 0.0
        %1211 = vmatprep.subr.mxu0 0.0
        %1212 = vmatpush1.msra.mxu0 0.0
        %1213 = vmatprep.subr.mxu0 0.0
        %1214 = vmatpush1.msra.mxu0 0.0
        %1215 = vmatprep.subr.mxu0 0.0
        %1216 = vmatpush1.msra.mxu0 0.0
        %1217 = vmatprep.subr.mxu0 0.0
        %1218 = vmatpush1.msra.mxu0 0.0
        %1219 = vmatprep.subr.mxu0 0.0
        %1220 = vmatpush1.msra.mxu0 0.0
        %1221 = vmatprep.subr.mxu0 0.0
        %1222 = vmatpush1.msra.mxu0 0.0
        %1223 = vmatprep.subr.mxu0 0.0
        %1224 = vmatpush1.msra.mxu0 0.0
        %1225 = vmatprep.subr.mxu0 0.0
        %1226 = vmatpush1.msra.mxu0 0.0
        %1227 = vmatprep.subr.mxu0 0.0
        %1228 = vmatpush1.msra.mxu0 0.0
        %1229 = vmatprep.subr.mxu0 0.0
        %1230 = vmatpush1.msra.mxu0 0.0
        %1231 = vmatprep.subr.mxu0 0.0
        %1232 = vmatpush1.msra.mxu0 0.0
        %1233 = vmatprep.subr.mxu0 0.0
        %1234 = vmatpush1.msra.mxu0 0.0
        %1235 = vmatprep.subr.mxu0 0.0
        %1236 = vmatpush1.msra.mxu0 0.0
        %1237 = vmatprep.subr.mxu0 0.0
        %1238 = vmatpush1.msra.mxu0 0.0
        %1239 = vmatprep.subr.mxu0 0.0
        %1240 = vmatpush1.msra.mxu0 0.0
        %1241 = vmatprep.subr.mxu0 0.0
        %1242 = vmatpush1.msra.mxu0 0.0
        %1243 = vmatprep.subr.mxu0 0.0
        %1244 = vmatpush1.msra.mxu0 0.0
        %1245 = vmatprep.subr.mxu0 0.0
        %1246 = vmatpush1.msra.mxu0 0.0
        %1247 = vmatprep.subr.mxu0 0.0
        %1248 = vmatpush1.msra.mxu0 0.0
        %1249 = vmatprep.subr.mxu0 0.0
        %1250 = vmatpush1.msra.mxu0 0.0
        %1251 = vmatprep.subr.mxu0 0.0
        %1252 = vmatpush1.msra.mxu0 0.0
        %1253 = vmatprep.subr.mxu0 0.0
        %1254 = vmatpush1.msra.mxu0 0.0
        %1255 = vmatprep.subr.mxu0 0.0
        %1256 = vmatpush1.msra.mxu0 0.0
        %1257 = vmatprep.subr.mxu0 0.0
        %1258 = vmatpush1.msra.mxu0 0.0
        %1259 = vmatprep.subr.mxu0 0.0
        %1260 = vmatpush1.msra.mxu0 0.0
        %1261 = vmatprep.subr.mxu0 0.0
        %1262 = vmatpush1.msra.mxu0 0.0
        %1263 = vmatprep.subr.mxu0 0.0
        %1264 = vmatpush1.msra.mxu0 0.0
        %1265 = vmatprep.mubr.f32.mxu0 0.0
        %1266 = vmatmul.mubr.f32.gmra.mrb[0].mxu0 %v1195
        %v1267 = vpop.f32.mrb[0].mxu0
        %v1268 = vadd.f32 0.0, %v1267
        %v1269 = vpop.f32.mrb[0].mxu0
        %v1270 = vadd.f32 0.0, %v1269
        %1271 = vdwg.mxu0
        %v1272 = vadd.f32 %v1163, %v1268
        %v1273 = vadd.f32 %v1164, %v1270
        %v1274 = vld [vmem:[#allocation2] sm:$0x3f]
        %v1276 = vcombine.high %v1274, %v1274
        %v1278 = vunpack.c.l.s4 1983009808
        %v1279 = vunpack.c.0.s8 %v1278
        %v1280 = vlaneseq
        %v1281 = vshrl.u32 %v1280, 7
        %v1282 = vsub.s32 %v1279, %v1281
        %v1283 = vrot.slane %v1274, %v1282
        %v1285 = vunpack.c.l.s4 1983009808
        %v1286 = vunpack.c.0.s8 %v1285
        %v1287 = vlaneseq
        %v1288 = vshrl.u32 %v1287, 7
        %v1289 = vsub.s32 %v1286, %v1288
        %v1290 = vrot.slane %v1276, %v1289
        %v1291 = vcombine.high %v1283, %v1283
        %1292 = vrot.lane.b32.xlu0 %v1283, 94
        %v1293 = vpop.permute.xlu0 %1292
        %1294 = vrot.lane.b32.xlu0 %v1291, 94
        %v1295 = vpop.permute.xlu0 %1294
        %1296 = vrot.lane.b32.xlu0 %v1290, 94
        %v1297 = vpop.permute.xlu0 %1296
        %vm1298 = vcmask 769024
        %v1299 = vsel %vm1298, %v1293, %v1295
        %v1300 = vsel %vm1298, %v1295, %v1297
        %v1303 = vsel %vm595, %v1299, 0.0
        %v1304 = vsel %vm596, %v1300, 0.0
        %s1305 = scalar_lea.vmem %s3, 32
        %v1306 = vld [vmem:[%s1305] sm:$0xf]
        %v1308 = vsel %vm433, %v1306, 0
        %v1311 = vsel %vm327, %v1303, 0
        %v1314 = vsel %vm327, %v1304, 0
        %1316 = vmatprep.subr.mxu0 %v1314
        %1317 = vmatpush1.msra.mxu0 %v1311
        %1318 = vmatprep.subr.mxu0 0.0
        %1319 = vmatpush1.msra.mxu0 0.0
        %1320 = vmatprep.subr.mxu0 0.0
        %1321 = vmatpush1.msra.mxu0 0.0
        %1322 = vmatprep.subr.mxu0 0.0
        %1323 = vmatpush1.msra.mxu0 0.0
        %1324 = vmatprep.subr.mxu0 0.0
        %1325 = vmatpush1.msra.mxu0 0.0
        %1326 = vmatprep.subr.mxu0 0.0
        %1327 = vmatpush1.msra.mxu0 0.0
        %1328 = vmatprep.subr.mxu0 0.0
        %1329 = vmatpush1.msra.mxu0 0.0
        %1330 = vmatprep.subr.mxu0 0.0
        %1331 = vmatpush1.msra.mxu0 0.0
        %1332 = vmatprep.subr.mxu0 0.0
        %1333 = vmatpush1.msra.mxu0 0.0
        %1334 = vmatprep.subr.mxu0 0.0
        %1335 = vmatpush1.msra.mxu0 0.0
        %1336 = vmatprep.subr.mxu0 0.0
        %1337 = vmatpush1.msra.mxu0 0.0
        %1338 = vmatprep.subr.mxu0 0.0
        %1339 = vmatpush1.msra.mxu0 0.0
        %1340 = vmatprep.subr.mxu0 0.0
        %1341 = vmatpush1.msra.mxu0 0.0
        %1342 = vmatprep.subr.mxu0 0.0
        %1343 = vmatpush1.msra.mxu0 0.0
        %1344 = vmatprep.subr.mxu0 0.0
        %1345 = vmatpush1.msra.mxu0 0.0
        %1346 = vmatprep.subr.mxu0 0.0
        %1347 = vmatpush1.msra.mxu0 0.0
        %1348 = vmatprep.subr.mxu0 0.0
        %1349 = vmatpush1.msra.mxu0 0.0
        %1350 = vmatprep.subr.mxu0 0.0
        %1351 = vmatpush1.msra.mxu0 0.0
        %1352 = vmatprep.subr.mxu0 0.0
        %1353 = vmatpush1.msra.mxu0 0.0
        %1354 = vmatprep.subr.mxu0 0.0
        %1355 = vmatpush1.msra.mxu0 0.0
        %1356 = vmatprep.subr.mxu0 0.0
        %1357 = vmatpush1.msra.mxu0 0.0
        %1358 = vmatprep.subr.mxu0 0.0
        %1359 = vmatpush1.msra.mxu0 0.0
        %1360 = vmatprep.subr.mxu0 0.0
        %1361 = vmatpush1.msra.mxu0 0.0
        %1362 = vmatprep.subr.mxu0 0.0
        %1363 = vmatpush1.msra.mxu0 0.0
        %1364 = vmatprep.subr.mxu0 0.0
        %1365 = vmatpush1.msra.mxu0 0.0
        %1366 = vmatprep.subr.mxu0 0.0
        %1367 = vmatpush1.msra.mxu0 0.0
        %1368 = vmatprep.subr.mxu0 0.0
        %1369 = vmatpush1.msra.mxu0 0.0
        %1370 = vmatprep.subr.mxu0 0.0
        %1371 = vmatpush1.msra.mxu0 0.0
        %1372 = vmatprep.subr.mxu0 0.0
        %1373 = vmatpush1.msra.mxu0 0.0
        %1374 = vmatprep.subr.mxu0 0.0
        %1375 = vmatpush1.msra.mxu0 0.0
        %1376 = vmatprep.subr.mxu0 0.0
        %1377 = vmatpush1.msra.mxu0 0.0
        %1378 = vmatprep.subr.mxu0 0.0
        %1379 = vmatpush1.msra.mxu0 0.0
        %1380 = vmatprep.mubr.f32.mxu0 0.0
        %1381 = vmatmul.mubr.f32.gmra.mrb[0].mxu0 %v1308
        %v1382 = vpop.f32.mrb[0].mxu0
        %v1383 = vadd.f32 0.0, %v1382
        %v1384 = vpop.f32.mrb[0].mxu0
        %v1385 = vadd.f32 0.0, %v1384
        %1386 = vdwg.mxu0
        %v1387 = vadd.f32 %v1272, %v1383
        %v1388 = vadd.f32 %v1273, %v1385
        %v1389 = vld [vmem:[%s4] sm:$0xf]
        %1391 = vset.pattern.permute.xlu0 0
        %1392 = vperm.xlu0 %1391, %v1389
        %v1393 = vpop.permute.xlu0 %1392
        %v1395 = vadd.f32 %v1387, %v1393
        %v1396 = vadd.f32 %v1388, %v1393
        %v1397 = vsub.f32 0.0, %v1395
        %v1398 = vsub.f32 0.0, %v1396
        %v1399 = vmul.f32 %v1397, 1.442695
        %v1400 = vpow.pop %v1399
        %v1401 = vmul.f32 %v1398, 1.442695
        %v1402 = vpow.pop %v1401
        %v1403 = vadd.f32 %v1400, 1.0
        %v1404 = vadd.f32 %v1402, 1.0
        %v1405 = vrcp.pop %v1403
        %v1406 = vmul.f32 1.0, %v1405
        %v1407 = vrcp.pop %v1404
        %v1408 = vmul.f32 1.0, %v1407
        %v1409 = vmul.f32 %v1395, %v1406
        %v1410 = vmul.f32 %v1396, %v1408
        %v1412 = vadd.f32 %v1409, %v223
        %v1413 = vadd.f32 %v1410, %v232
        %v1416 = vcombine.low %v1412, %v1413
        %1418 = vst [vmem:[%s217] sm:$0xff] %v1416
        %s1419 = sand.u32 %s137, 1
        %s1420 = scalar_lea.sflag [#allocation4], %s1419
        %s1421 = sand.u32 %s137, 1
        %s1422 = smul.addr %s1421, 8
        %s1423 = scalar_lea.vmem [#allocation3], %s1422
        // Predicated region
        $region41: #{tpu_custom_call.1} parent=39 // pred_check
          %p1424 = pneg %p147
        $region42: #{tpu_custom_call.1} parent=39 // pred_check_branch
          %1426 = sbr.rel (%p1424) target = $region44
        $region43: #{tpu_custom_call.1} parent=39 // pred_region
          %s1428 = ssub.s32 128, 128
          %1429 = vsyncadd %s1420, %s1428
          %s1430 = smul.addr %s19, 2
          %s1431 = smul.addr %s1430, 64
          %s1432 = scalar_lea.hbm %s5, %s1431
          %s1434 = sshll.u32 %s1423, 4
          %s1435 = int_to_ptr.vmem [resolvable:$true] %s1434
          %1437 = dma.vmem_to_hbm [thread:$0]  %s1435, 128, %s1432, %s1420
        $region44: #{tpu_custom_call.1} parent=39 // pred_fallthru
          _
      $region40: #{tpu_custom_call.1} parent=5 // pred_fallthru
        _
      %p1438 = scmp.le.s32.totalorder 2, %s14
      // Predicated region
      $region45: #{tpu_custom_call.1} parent=5 // pred_check
        %p1439 = pneg %p1438
      $region46: #{tpu_custom_call.1} parent=5 // pred_check_branch
        %1441 = sbr.rel (%p1439) target = $region48
      $region47: #{tpu_custom_call.1} parent=5 // pred_region
        %s1442 = ssub.s32 %s14, 2
        // Predicated region
        $region49: #{tpu_custom_call.1} parent=47 // pred_check
          %p1443 = pneg %p153
        $region50: #{tpu_custom_call.1} parent=47 // pred_check_branch
          %1445 = sbr.rel (%p1443) target = $region52
        $region51: #{tpu_custom_call.1} parent=47 // pred_region
          %s1446 = sand.u32 %s138, 1
          %s1447 = scalar_lea.sflag [#allocation4], %s1446
          %s1448 = sand.u32 %s138, 1
          %s1449 = smul.addr %s1448, 8
          %s1450 = scalar_lea.vmem [#allocation3], %s1449
          %1451 = dma.done %s1447, 128
        $region52: #{tpu_custom_call.1} parent=47 // pred_fallthru
          _
      $region48: #{tpu_custom_call.1} parent=5 // pred_fallthru
        _
    $region6: #{tpu_custom_call.1} parent=1 // loop_footer
      %s18 = sadd.s32 1, %s14
    $region7: #{tpu_custom_call.1} parent=1 // loop_footer_branch
      %13 = sbr.rel target = $region3
    $region8: #{tpu_custom_call.1} parent=1 // loop_exit
      _
    %1452 = vsyncpa [#allocation4], 1
    %s1453 = scalar_lea.sflag [#allocation4], 1
    %1454 = vsyncpa %s1453, 1

</llo_original>
